<compile_context>
chip_gen: v6e
topology: v6e:2x2x1
jax: 0.10.0
libtpu: 0.0.40
codegen_flags: <defaults>
</compile_context>

<pallas_src>
import functools

import jax
import jax.numpy as jnp
from jax.experimental import pallas as pl
from jax.experimental.pallas import tpu as pltpu


def _round_up(x, m):
    return ((x + m - 1) // m) * m


def cnn_classifier_kernel(x_ref, wconv_ref, bconv_ref, wfc_ref, bfc_ref, o_ref,
                          *, lp, l_out):
    """Conv1d (K shifted MXU dots) + masked global-max + bias/ReLU + fc + sigmoid.

    x_ref:     (TB, L_in_pad, E)  bf16 embedded block (un-duplicated)
    wconv_ref: (K, E, F)          bf16 conv weight
    bconv_ref: (1, F)             f32 conv bias
    wfc_ref:   (1, F)             bf16 fc weight
    bfc_ref:   (1, 1)             f32 fc bias
    o_ref:     (1, 1, TB)         f32 probabilities (lane-dense on batch)
    """
    tb, _, e = x_ref.shape
    k_size, _, f = wconv_ref.shape

    # Conv1d as K shifted-window matmuls, all accumulated in f32 on the MXU:
    #   acc[b*lp + t, f] = sum_k sum_e x[b, t + k, e] * w[k, e, f]
    # lp % 16 == 0 keeps the bf16 (tb, lp, e) -> (tb*lp, e) merge layout-free.
    acc = jnp.zeros((tb * lp, f), jnp.float32)
    for k in range(k_size):
        xk = x_ref[:, pl.ds(k, lp), :].reshape(tb * lp, e)       # bf16 shifted window
        acc = acc + jnp.dot(xk, wconv_ref[k],
                            preferred_element_type=jnp.float32)  # (tb*lp, F) f32

    # Global max pool over time, BEFORE bias/ReLU (monotonicity + time-invariant bias).
    # Time rows t >= l_out are padding windows (mix real + zero-padded embedding rows),
    # so mask them to -inf before the max.
    acc3 = acc.reshape(tb, lp, f)
    if lp != l_out:
        t_idx = jax.lax.broadcasted_iota(jnp.int32, (tb, lp, f), 1)
        acc3 = jnp.where(t_idx < l_out, acc3, -jnp.inf)
    pooled = jnp.max(acc3, axis=1)                               # (TB, F) f32
    y = jnp.maximum(pooled + bconv_ref[...], 0.0)                # ReLU(max + bias)

    # fc: Linear(F, 1) as a single-pass bf16 MXU dot (contract F), lane-dense (1, TB).
    logits = jax.lax.dot_general(
        wfc_ref[...], y.astype(jnp.bfloat16),
        dimension_numbers=(((1,), (1,)), ((), ())),
        preferred_element_type=jnp.float32) + bfc_ref[...]       # (1, TB)

    o_ref[0] = jax.nn.sigmoid(logits)


@functools.partial(jax.jit, static_argnames=("tb",))
def cnn_classifier_forward(tokens, emb_w, wconv, bconv, wfc, bfc, *, tb=None):
    """tokens: (B, L) int32. Returns sigmoid probabilities of shape (B,)."""
    B, L = tokens.shape
    K, E, F = wconv.shape               # conv weight stored as (K, E, F) = torch (F, E, K).T
    L_out = L - K + 1

    # Time paddings: lp = pooled window count rounded to 16 (bf16 sublane packing),
    # lin = input rows needed by the K shifted windows, also rounded to 16.
    lp = _round_up(L_out, 16)
    lin = _round_up(lp + K - 1, 16)

    # Embedding lookup (data-dependent gather -> single wrapper-side XLA op).
    # TODO(synk): a fully in-kernel gather (scalar-prefetched tokens + per-row DMA from an
    # HBM embedding table) has no clean BlockSpec equivalent at these shapes.
    x = jnp.take(emb_w, tokens, axis=0).astype(jnp.bfloat16)     # (B, L, E) bf16
    if lin != L:
        x = jnp.pad(x, ((0, 0), (0, lin - L), (0, 0)))           # zero rows, masked in-kernel

    # Batch blocking: one big block when it fits (v5e/v6e: grid is a serial loop, so fewer
    # steps is strictly better), 256-row blocks otherwise; keep nb even so v7x's 2
    # TensorCores get equal work.  Per-block VMEM at tb=256, lin=32, E=32, F=128 is ~3 MiB.
    if tb is None:
        tb = min(_round_up(B, 8), 256)
    tb = max(8, _round_up(tb, 8))
    nb = pl.cdiv(B, tb)
    if nb > 1 and nb % 2 == 1:
        nb += 1                                                   # even split across TCs
    b_pad = nb * tb
    if b_pad != B:
        x = jnp.pad(x, ((0, b_pad - B), (0, 0), (0, 0)))          # zero rows, sliced off below

    wconv_b = wconv.astype(jnp.bfloat16)                          # (K, E, F)
    wfc_b = wfc.astype(jnp.bfloat16)                              # (1, F)

    kernel = functools.partial(cnn_classifier_kernel, lp=lp, l_out=L_out)

    out = pl.pallas_call(
        kernel,
        out_shape=jax.ShapeDtypeStruct((nb, 1, tb), jnp.float32),
        grid_spec=pltpu.PrefetchScalarGridSpec(
            num_scalar_prefetch=0,
            grid=(nb,),                                            # batch blocks
            in_specs=[
                pl.BlockSpec((tb, lin, E), lambda b: (b, 0, 0)),   # embedded block (bf16)
                pl.BlockSpec((K, E, F), lambda b: (0, 0, 0)),      # conv weight (bf16)
                pl.BlockSpec((1, F), lambda b: (0, 0)),            # conv bias (f32)
                pl.BlockSpec((1, F), lambda b: (0, 0)),            # fc weight (bf16)
                pl.BlockSpec((1, 1), lambda b: (0, 0)),            # fc bias (f32)
            ],
            out_specs=pl.BlockSpec((1, 1, tb), lambda b: (b, 0, 0)),
        ),
        compiler_params=pltpu.CompilerParams(
            dimension_semantics=("parallel",),     # shard batch blocks across TCs (v7x)
            vmem_limit_bytes=48 * 1024 * 1024),    # above v5e/v6e defaults, safe on v7x
    )(x, wconv_b, bconv, wfc_b, bfc)

    # torch: sigmoid(logits).squeeze()  -> (B,) for B > 1
    return out.reshape(b_pad)[:B]


def reference_forward(tokens, emb_w, wconv, bconv, wfc, bfc):
    """Pure-JAX f32 reference matching the PyTorch module."""
    x = jnp.take(emb_w, tokens, axis=0)                  # (B, L, E)
    K, E, F = wconv.shape
    L_out = x.shape[1] - K + 1
    acc = jnp.zeros((x.shape[0], L_out, F), jnp.float32)
    for k in range(K):
        acc = acc + jnp.einsum("ble,ef->blf", x[:, k:k + L_out, :], wconv[k])
    y = jnp.maximum(acc + bconv[None], 0.0)
    pooled = jnp.max(y, axis=1)
    logits = pooled @ wfc[0] + bfc[0, 0]
    return jax.nn.sigmoid(logits)


def init_params(key, vocab_size, embed_dim, num_filters, kernel_size):
    k_emb, k_wc, k_bc, k_wf, k_bf = jax.random.split(key, 5)
    emb_w = jax.random.normal(k_emb, (vocab_size, embed_dim), jnp.float32)
    emb_w = emb_w.at[0].set(0.0)                          # padding_idx=0 -> zero row
    fan_in_conv = embed_dim * kernel_size
    bound_c = 1.0 / jnp.sqrt(fan_in_conv)
    # conv weight stored as (K, E, F) (torch layout (F, E, K) transposed for matmul use)
    wconv = jax.random.uniform(k_wc, (kernel_size, embed_dim, num_filters),
                               jnp.float32, -bound_c, bound_c)
    bconv = jax.random.uniform(k_bc, (1, num_filters), jnp.float32, -bound_c, bound_c)
    bound_f = 1.0 / jnp.sqrt(num_filters)
    wfc = jax.random.uniform(k_wf, (1, num_filters), jnp.float32, -bound_f, bound_f)
    bfc = jax.random.uniform(k_bf, (1, 1), jnp.float32, -bound_f, bound_f)
    return emb_w, wconv, bconv, wfc, bfc


if __name__ == "__main__":
    # Small shapes consistent with the module's forward:
    VOCAB, EMBED, FILTERS, KSIZE = 64, 32, 128, 5
    BATCH, SEQ = 4, 16

    key = jax.random.PRNGKey(0)
    k_params, k_tok = jax.random.split(key)
    emb_w, wconv, bconv, wfc, bfc = init_params(k_params, VOCAB, EMBED, FILTERS, KSIZE)
    tokens = jax.random.randint(k_tok, (BATCH, SEQ), 0, VOCAB, dtype=jnp.int32)

    probs = cnn_classifier_forward(tokens, emb_w, wconv, bconv, wfc, bfc)
    jax.block_until_ready(probs)

    ref = reference_forward(tokens, emb_w, wconv, bconv, wfc, bfc)
    assert probs.shape == (BATCH,)
    assert bool(jnp.all((probs >= 0.0) & (probs <= 1.0)))
    # bf16 matmul operands with f32 accumulation -> small deviation vs. f32 reference.
    assert bool(jnp.allclose(probs, ref, atol=2e-2)), (probs, ref)
    print("KERNEL_OK")
</pallas_src>

<mosaic_0001>
module attributes {stable_mosaic.version = 11 : i64} {
  func.func @cnn_classifier_kernel(%arg0: i32, %arg1: memref<8x32x32xbf16, #tpu.memory_space<vmem>>, %arg2: memref<5x32x128xbf16, #tpu.memory_space<vmem>>, %arg3: memref<1x128xf32, #tpu.memory_space<vmem>>, %arg4: memref<1x128xbf16, #tpu.memory_space<vmem>>, %arg5: memref<1x1xf32, #tpu.memory_space<vmem>>, %arg6: memref<1x1x8xf32, #tpu.memory_space<vmem>>) attributes {dimension_semantics = [#tpu.dimension_semantics<parallel>], iteration_bounds = array<i64: 1>, scalar_prefetch = 0 : i64, scratch_operands = 0 : i64, tpu.core_type = #tpu.core_type<tc>, window_params = [{transform_indices = @transform_0, window_bounds = array<i64: 8, 32, 32>}, {pipeline_mode = #tpu.pipeline_mode<synchronous>, transform_indices = @transform_1, window_bounds = array<i64: 5, 32, 128>}, {pipeline_mode = #tpu.pipeline_mode<synchronous>, transform_indices = @transform_2, window_bounds = array<i64: 1, 128>}, {pipeline_mode = #tpu.pipeline_mode<synchronous>, transform_indices = @transform_3, window_bounds = array<i64: 1, 128>}, {pipeline_mode = #tpu.pipeline_mode<synchronous>, transform_indices = @transform_4, window_bounds = array<i64: 1, 1>}, {transform_indices = @transform_5, window_bounds = array<i64: 1, 1, 8>}]} {
    %cst = arith.constant 0.000000e+00 : f32
    %0 = vector.broadcast %cst : f32 to vector<128x128xf32>
    %c0 = arith.constant 0 : index
    %c0_0 = arith.constant 0 : index
    %c0_1 = arith.constant 0 : index
    %1 = vector.load %arg1[%c0, %c0_0, %c0_1] : memref<8x32x32xbf16, #tpu.memory_space<vmem>>, vector<8x16x32xbf16>
    %2 = vector.shape_cast %1 : vector<8x16x32xbf16> to vector<128x32xbf16>
    %c0_2 = arith.constant 0 : index
    %c0_3 = arith.constant 0 : index
    %c0_4 = arith.constant 0 : index
    %3 = vector.load %arg2[%c0_2, %c0_3, %c0_4] : memref<5x32x128xbf16, #tpu.memory_space<vmem>>, vector<1x32x128xbf16>
    %4 = vector.shape_cast %3 : vector<1x32x128xbf16> to vector<32x128xbf16>
    %cst_5 = arith.constant dense<0.000000e+00> : vector<128x128xf32>
    %5 = tpu.matmul %2, %4, %cst_5 {dimension_numbers = #tpu.dot_dimension_numbers<[1], [0], [0], [1], [0, 0, 1, 1], [], []>} : vector<128x32xbf16>, vector<32x128xbf16>, vector<128x128xf32> -> vector<128x128xf32>
    %6 = arith.addf %0, %5 : vector<128x128xf32>
    %c0_6 = arith.constant 0 : index
    %c1 = arith.constant 1 : index
    %c0_7 = arith.constant 0 : index
    %7 = vector.load %arg1[%c0_6, %c1, %c0_7] : memref<8x32x32xbf16, #tpu.memory_space<vmem>>, vector<8x16x32xbf16>
    %8 = vector.shape_cast %7 : vector<8x16x32xbf16> to vector<128x32xbf16>
    %c1_8 = arith.constant 1 : index
    %c0_9 = arith.constant 0 : index
    %c0_10 = arith.constant 0 : index
    %9 = vector.load %arg2[%c1_8, %c0_9, %c0_10] : memref<5x32x128xbf16, #tpu.memory_space<vmem>>, vector<1x32x128xbf16>
    %10 = vector.shape_cast %9 : vector<1x32x128xbf16> to vector<32x128xbf16>
    %cst_11 = arith.constant dense<0.000000e+00> : vector<128x128xf32>
    %11 = tpu.matmul %8, %10, %cst_11 {dimension_numbers = #tpu.dot_dimension_numbers<[1], [0], [0], [1], [0, 0, 1, 1], [], []>} : vector<128x32xbf16>, vector<32x128xbf16>, vector<128x128xf32> -> vector<128x128xf32>
    %12 = arith.addf %6, %11 : vector<128x128xf32>
    %c0_12 = arith.constant 0 : index
    %c2 = arith.constant 2 : index
    %c0_13 = arith.constant 0 : index
    %13 = vector.load %arg1[%c0_12, %c2, %c0_13] : memref<8x32x32xbf16, #tpu.memory_space<vmem>>, vector<8x16x32xbf16>
    %14 = vector.shape_cast %13 : vector<8x16x32xbf16> to vector<128x32xbf16>
    %c2_14 = arith.constant 2 : index
    %c0_15 = arith.constant 0 : index
    %c0_16 = arith.constant 0 : index
    %15 = vector.load %arg2[%c2_14, %c0_15, %c0_16] : memref<5x32x128xbf16, #tpu.memory_space<vmem>>, vector<1x32x128xbf16>
    %16 = vector.shape_cast %15 : vector<1x32x128xbf16> to vector<32x128xbf16>
    %cst_17 = arith.constant dense<0.000000e+00> : vector<128x128xf32>
    %17 = tpu.matmul %14, %16, %cst_17 {dimension_numbers = #tpu.dot_dimension_numbers<[1], [0], [0], [1], [0, 0, 1, 1], [], []>} : vector<128x32xbf16>, vector<32x128xbf16>, vector<128x128xf32> -> vector<128x128xf32>
    %18 = arith.addf %12, %17 : vector<128x128xf32>
    %c0_18 = arith.constant 0 : index
    %c3 = arith.constant 3 : index
    %c0_19 = arith.constant 0 : index
    %19 = vector.load %arg1[%c0_18, %c3, %c0_19] : memref<8x32x32xbf16, #tpu.memory_space<vmem>>, vector<8x16x32xbf16>
    %20 = vector.shape_cast %19 : vector<8x16x32xbf16> to vector<128x32xbf16>
    %c3_20 = arith.constant 3 : index
    %c0_21 = arith.constant 0 : index
    %c0_22 = arith.constant 0 : index
    %21 = vector.load %arg2[%c3_20, %c0_21, %c0_22] : memref<5x32x128xbf16, #tpu.memory_space<vmem>>, vector<1x32x128xbf16>
    %22 = vector.shape_cast %21 : vector<1x32x128xbf16> to vector<32x128xbf16>
    %cst_23 = arith.constant dense<0.000000e+00> : vector<128x128xf32>
    %23 = tpu.matmul %20, %22, %cst_23 {dimension_numbers = #tpu.dot_dimension_numbers<[1], [0], [0], [1], [0, 0, 1, 1], [], []>} : vector<128x32xbf16>, vector<32x128xbf16>, vector<128x128xf32> -> vector<128x128xf32>
    %24 = arith.addf %18, %23 : vector<128x128xf32>
    %c0_24 = arith.constant 0 : index
    %c4 = arith.constant 4 : index
    %c0_25 = arith.constant 0 : index
    %25 = vector.load %arg1[%c0_24, %c4, %c0_25] : memref<8x32x32xbf16, #tpu.memory_space<vmem>>, vector<8x16x32xbf16>
    %26 = vector.shape_cast %25 : vector<8x16x32xbf16> to vector<128x32xbf16>
    %c4_26 = arith.constant 4 : index
    %c0_27 = arith.constant 0 : index
    %c0_28 = arith.constant 0 : index
    %27 = vector.load %arg2[%c4_26, %c0_27, %c0_28] : memref<5x32x128xbf16, #tpu.memory_space<vmem>>, vector<1x32x128xbf16>
    %28 = vector.shape_cast %27 : vector<1x32x128xbf16> to vector<32x128xbf16>
    %cst_29 = arith.constant dense<0.000000e+00> : vector<128x128xf32>
    %29 = tpu.matmul %26, %28, %cst_29 {dimension_numbers = #tpu.dot_dimension_numbers<[1], [0], [0], [1], [0, 0, 1, 1], [], []>} : vector<128x32xbf16>, vector<32x128xbf16>, vector<128x128xf32> -> vector<128x128xf32>
    %30 = arith.addf %24, %29 : vector<128x128xf32>
    %31 = vector.shape_cast %30 : vector<128x128xf32> to vector<8x16x128xf32>
    %32 = tpu.iota {dimensions = array<i32: 1>} : vector<8x16x128xi32>
    %c12_i32 = arith.constant 12 : i32
    %33 = vector.broadcast %c12_i32 : i32 to vector<8x16x128xi32>
    %34 = arith.cmpi slt, %32, %33 : vector<8x16x128xi32>
    %cst_30 = arith.constant 0xFF800000 : f32
    %35 = vector.broadcast %cst_30 : f32 to vector<8x16x128xf32>
    %36 = arith.select %34, %31, %35 : vector<8x16x128xi1>, vector<8x16x128xf32>
    %cst_31 = arith.constant dense<0xFF800000> : vector<8x128xf32>
    %37 = vector.multi_reduction <maximumf>, %36, %cst_31 [1] : vector<8x16x128xf32> to vector<8x128xf32>
    %c0_32 = arith.constant 0 : index
    %c0_33 = arith.constant 0 : index
    %38 = vector.load %arg3[%c0_32, %c0_33] : memref<1x128xf32, #tpu.memory_space<vmem>>, vector<1x128xf32>
    %39 = vector.broadcast %38 : vector<1x128xf32> to vector<8x128xf32>
    %40 = arith.addf %37, %39 : vector<8x128xf32>
    %cst_34 = arith.constant 0.000000e+00 : f32
    %41 = vector.broadcast %cst_34 : f32 to vector<8x128xf32>
    %42 = arith.maximumf %40, %41 : vector<8x128xf32>
    %c0_35 = arith.constant 0 : index
    %c0_36 = arith.constant 0 : index
    %43 = vector.load %arg4[%c0_35, %c0_36] : memref<1x128xbf16, #tpu.memory_space<vmem>>, vector<1x128xbf16>
    %44 = arith.truncf %42 : vector<8x128xf32> to vector<8x128xbf16>
    %cst_37 = arith.constant dense<0.000000e+00> : vector<1x8xf32>
    %45 = tpu.matmul %43, %44, %cst_37 {dimension_numbers = #tpu.dot_dimension_numbers<[1], [1], [0], [0], [0, 0, 1, 0], [], []>} : vector<1x128xbf16>, vector<8x128xbf16>, vector<1x8xf32> -> vector<1x8xf32>
    %c0_38 = arith.constant 0 : index
    %c0_39 = arith.constant 0 : index
    %46 = vector.load %arg5[%c0_38, %c0_39] : memref<1x1xf32, #tpu.memory_space<vmem>>, vector<1x1xf32>
    %47 = vector.broadcast %46 : vector<1x1xf32> to vector<1x8xf32>
    %48 = arith.addf %45, %47 : vector<1x8xf32>
    %49 = arith.negf %48 : vector<1x8xf32>
    %50 = math.exp %49 : vector<1x8xf32>
    %cst_40 = arith.constant 1.000000e+00 : f32
    %51 = vector.broadcast %cst_40 : f32 to vector<1x8xf32>
    %52 = arith.addf %51, %50 : vector<1x8xf32>
    %53 = arith.divf %51, %52 : vector<1x8xf32>
    %c0_41 = arith.constant 0 : index
    %c0_42 = arith.constant 0 : index
    %c0_43 = arith.constant 0 : index
    %54 = vector.load %arg6[%c0_41, %c0_42, %c0_43] : memref<1x1x8xf32, #tpu.memory_space<vmem>>, vector<1x1x8xf32>
    %55 = vector.shape_cast %54 : vector<1x1x8xf32> to vector<1x8xf32>
    %56 = vector.shape_cast %53 : vector<1x8xf32> to vector<1x1x8xf32>
    tpu.vector_store %arg6[%c0_41, %c0_42, %c0_43], %56 {strides = array<i32>} : memref<1x1x8xf32, #tpu.memory_space<vmem>>, vector<1x1x8xf32>,
    return
  }
  func.func @transform_0(%arg0: i32) -> (i32, i32, i32) {
    %c0_i32 = arith.constant 0 : i32
    %c0_i32_0 = arith.constant 0 : i32
    %c0_i32_1 = arith.constant 0 : i32
    return %arg0, %c0_i32, %c0_i32_0 : i32, i32, i32
  }
  func.func @transform_1(%arg0: i32) -> (i32, i32, i32) {
    %c0_i32 = arith.constant 0 : i32
    %c0_i32_0 = arith.constant 0 : i32
    %c0_i32_1 = arith.constant 0 : i32
    %c0_i32_2 = arith.constant 0 : i32
    return %c0_i32, %c0_i32_0, %c0_i32_1 : i32, i32, i32
  }
  func.func @transform_2(%arg0: i32) -> (i32, i32) {
    %c0_i32 = arith.constant 0 : i32
    %c0_i32_0 = arith.constant 0 : i32
    %c0_i32_1 = arith.constant 0 : i32
    return %c0_i32, %c0_i32_0 : i32, i32
  }
  func.func @transform_3(%arg0: i32) -> (i32, i32) {
    %c0_i32 = arith.constant 0 : i32
    %c0_i32_0 = arith.constant 0 : i32
    %c0_i32_1 = arith.constant 0 : i32
    return %c0_i32, %c0_i32_0 : i32, i32
  }
  func.func @transform_4(%arg0: i32) -> (i32, i32) {
    %c0_i32 = arith.constant 0 : i32
    %c0_i32_0 = arith.constant 0 : i32
    %c0_i32_1 = arith.constant 0 : i32
    return %c0_i32, %c0_i32_0 : i32, i32
  }
  func.func @transform_5(%arg0: i32) -> (i32, i32, i32) {
    %c0_i32 = arith.constant 0 : i32
    %c0_i32_0 = arith.constant 0 : i32
    %c0_i32_1 = arith.constant 0 : i32
    return %arg0, %c0_i32, %c0_i32_0 : i32, i32, i32
  }
}

</mosaic_0001>

<llo_original>
// kernel: cnn_classifier_forward.1
$region0: #{cnn_classifier_forward.1}
  #allocation0 [shape = 'u32[]', space=smem, size = 0x4, offset = 0x4, fixed_abs, tag = 'smem constant byte address 0x4 - core index']
  #allocation1 [shape = 'u32[144,128]{1,0:T(1,128)}', space=vmem, size = 0x12000, scoped, tag = 'internal scratch']
  #allocation2 [shape = 'f32[1,1]{1,0:T(1,128)S(1)}', space=vmem, size = 0x200, scoped, tag = 'scoped memory for cnn_classifier_forward.1']
  %s0 = inlined_call_operand.vmem [shape: bf16[8,32,32], index: 0, kind: input, shape index: {}]
  %s1 = inlined_call_operand.vmem [shape: bf16[5,32,128], index: 1, kind: input, shape index: {}]
  %s2 = inlined_call_operand.vmem [shape: f32[1,128], index: 2, kind: input, shape index: {}]
  %s3 = inlined_call_operand.vmem [shape: bf16[1,128], index: 3, kind: input, shape index: {}]
  %s4 = inlined_call_operand.<no memory space> [shape: f32[1,1], index: 4, kind: input, shape index: {}]
  %s5 = inlined_call_operand.vmem [shape: f32[1,1,8], index: 5, kind: output, shape index: {}]
  %s6 = sld [smem:[#allocation0]]
  $region30: #{cnn_classifier_forward.1} parent=0
    _
  %s8 = ssub.s32 1, %s6
  %s9 = scalar_select 0, %s8, %s6
  %v10 = vstv %s4
  %11 = vst [vmem:[#allocation2] sm:$0x1] %v10
  // Predicated region
  $region2: #{cnn_classifier_forward.1} parent=0 // pred_check
    _
  $region3: #{cnn_classifier_forward.1} parent=0 // pred_check_branch
    %13 = sbr.rel (0) target = $region5
  $region4: #{cnn_classifier_forward.1} parent=0 // pred_region
    _
  $region5: #{cnn_classifier_forward.1} parent=0 // pred_fallthru
    _
  // Predicated region
  $region6: #{cnn_classifier_forward.1} parent=0 // pred_check
    _
  $region7: #{cnn_classifier_forward.1} parent=0 // pred_check_branch
    %15 = sbr.rel (0) target = $region9
  $region8: #{cnn_classifier_forward.1} parent=0 // pred_region
    _
  $region9: #{cnn_classifier_forward.1} parent=0 // pred_fallthru
    _
  // Predicated region
  $region10: #{cnn_classifier_forward.1} parent=0 // pred_check
    _
  $region11: #{cnn_classifier_forward.1} parent=0 // pred_check_branch
    %17 = sbr.rel (0) target = $region13
  $region12: #{cnn_classifier_forward.1} parent=0 // pred_region
    _
  $region13: #{cnn_classifier_forward.1} parent=0 // pred_fallthru
    _
  // Predicated region
  $region14: #{cnn_classifier_forward.1} parent=0 // pred_check
    _
  $region15: #{cnn_classifier_forward.1} parent=0 // pred_check_branch
    %19 = sbr.rel (0) target = $region17
  $region16: #{cnn_classifier_forward.1} parent=0 // pred_region
    _
  $region17: #{cnn_classifier_forward.1} parent=0 // pred_fallthru
    _
  // Predicated region
  $region18: #{cnn_classifier_forward.1} parent=0 // pred_check
    _
  $region19: #{cnn_classifier_forward.1} parent=0 // pred_check_branch
    %21 = sbr.rel (0) target = $region21
  $region20: #{cnn_classifier_forward.1} parent=0 // pred_region
    _
  $region21: #{cnn_classifier_forward.1} parent=0 // pred_fallthru
    _
  %v23 = vld [vmem:[%s0] sm:$0xf]
  %v24 = vld [vmem:[%s0 + $0x4] sm:$0xf]
  %v25 = vld [vmem:[%s0 + $0x10] sm:$0xf]
  %v26 = vld [vmem:[%s0 + $0x14] sm:$0xf]
  %v27 = vld [vmem:[%s0 + $0x20] sm:$0xf]
  %v28 = vld [vmem:[%s0 + $0x24] sm:$0xf]
  %v29 = vld [vmem:[%s0 + $0x30] sm:$0xf]
  %v30 = vld [vmem:[%s0 + $0x34] sm:$0xf]
  %v31 = vld [vmem:[%s0 + $0x40] sm:$0xf]
  %v32 = vld [vmem:[%s0 + $0x44] sm:$0xf]
  %v33 = vld [vmem:[%s0 + $0x50] sm:$0xf]
  %v34 = vld [vmem:[%s0 + $0x54] sm:$0xf]
  %v35 = vld [vmem:[%s0 + $0x60] sm:$0xf]
  %v36 = vld [vmem:[%s0 + $0x64] sm:$0xf]
  %v37 = vld [vmem:[%s0 + $0x70] sm:$0xf]
  %v38 = vld [vmem:[%s0 + $0x74] sm:$0xf]
  %v39 = vld [vmem:[%s1] sm:$0xf]
  %v40 = vld [vmem:[%s1 + $0x4] sm:$0xf]
  %v41 = vld [vmem:[%s1 + $0x8] sm:$0xf]
  %v42 = vld [vmem:[%s1 + $0xc] sm:$0xf]
  %v43 = vld [vmem:[%s0 + $0x8] sm:$0x1]
  %v44 = vld [vmem:[%s0 + $0x18] sm:$0x1]
  %v45 = vld [vmem:[%s0 + $0x28] sm:$0x1]
  %v46 = vld [vmem:[%s0 + $0x38] sm:$0x1]
  %v47 = vld [vmem:[%s0 + $0x48] sm:$0x1]
  %v48 = vld [vmem:[%s0 + $0x58] sm:$0x1]
  %v49 = vld [vmem:[%s0 + $0x68] sm:$0x1]
  %v50 = vld [vmem:[%s0 + $0x78] sm:$0x1]
  %vm51 = vsmask.f32 3328
  %vm52 = vsmask.f32 7440
  %vm53 = vmor %vm51, %vm52
  %v55 = vshrl.u32 %v23, 16
  %v57 = vrot.slane %v55, 4
  %v58 = vshll.u32 %v23, 16
  %v60 = vrot.slane %v58, 5
  %v61 = vor.u32 %v57, %v60
  %v62 = vrot.slane %v61, 4
  %v64 = vshll.u32 %v24, 16
  %v66 = vrot.slane %v64, 5
  %v67 = vsel %vm53, %v62, %v66
  %v68 = vshrl.u32 %v24, 16
  %v70 = vrot.slane %v68, 4
  %v71 = vor.u32 %v70, %v66
  %v72 = vrot.slane %v71, 4
  %v74 = vshll.u32 %v43, 16
  %v76 = vrot.slane %v74, 5
  %v77 = vsel %vm53, %v72, %v76
  %v79 = vshrl.u32 %v25, 16
  %v81 = vrot.slane %v79, 4
  %v82 = vshll.u32 %v25, 16
  %v84 = vrot.slane %v82, 5
  %v85 = vor.u32 %v81, %v84
  %v86 = vrot.slane %v85, 4
  %v88 = vshll.u32 %v26, 16
  %v90 = vrot.slane %v88, 5
  %v91 = vsel %vm53, %v86, %v90
  %v92 = vshrl.u32 %v26, 16
  %v94 = vrot.slane %v92, 4
  %v95 = vor.u32 %v94, %v90
  %v96 = vrot.slane %v95, 4
  %v98 = vshll.u32 %v44, 16
  %v100 = vrot.slane %v98, 5
  %v101 = vsel %vm53, %v96, %v100
  %v103 = vshrl.u32 %v27, 16
  %v105 = vrot.slane %v103, 4
  %v106 = vshll.u32 %v27, 16
  %v108 = vrot.slane %v106, 5
  %v109 = vor.u32 %v105, %v108
  %v110 = vrot.slane %v109, 4
  %v112 = vshll.u32 %v28, 16
  %v114 = vrot.slane %v112, 5
  %v115 = vsel %vm53, %v110, %v114
  %v116 = vshrl.u32 %v28, 16
  %v118 = vrot.slane %v116, 4
  %v119 = vor.u32 %v118, %v114
  %v120 = vrot.slane %v119, 4
  %v122 = vshll.u32 %v45, 16
  %v124 = vrot.slane %v122, 5
  %v125 = vsel %vm53, %v120, %v124
  %v127 = vshrl.u32 %v29, 16
  %v129 = vrot.slane %v127, 4
  %v130 = vshll.u32 %v29, 16
  %v132 = vrot.slane %v130, 5
  %v133 = vor.u32 %v129, %v132
  %v134 = vrot.slane %v133, 4
  %v136 = vshll.u32 %v30, 16
  %v138 = vrot.slane %v136, 5
  %v139 = vsel %vm53, %v134, %v138
  %v140 = vshrl.u32 %v30, 16
  %v142 = vrot.slane %v140, 4
  %v143 = vor.u32 %v142, %v138
  %v144 = vrot.slane %v143, 4
  %v146 = vshll.u32 %v46, 16
  %v148 = vrot.slane %v146, 5
  %v149 = vsel %vm53, %v144, %v148
  %v151 = vshrl.u32 %v31, 16
  %v153 = vrot.slane %v151, 4
  %v154 = vshll.u32 %v31, 16
  %v156 = vrot.slane %v154, 5
  %v157 = vor.u32 %v153, %v156
  %v158 = vrot.slane %v157, 4
  %v160 = vshll.u32 %v32, 16
  %v162 = vrot.slane %v160, 5
  %v163 = vsel %vm53, %v158, %v162
  %v164 = vshrl.u32 %v32, 16
  %v166 = vrot.slane %v164, 4
  %v167 = vor.u32 %v166, %v162
  %v168 = vrot.slane %v167, 4
  %v170 = vshll.u32 %v47, 16
  %v172 = vrot.slane %v170, 5
  %v173 = vsel %vm53, %v168, %v172
  %v175 = vshrl.u32 %v33, 16
  %v177 = vrot.slane %v175, 4
  %v178 = vshll.u32 %v33, 16
  %v180 = vrot.slane %v178, 5
  %v181 = vor.u32 %v177, %v180
  %v182 = vrot.slane %v181, 4
  %v184 = vshll.u32 %v34, 16
  %v186 = vrot.slane %v184, 5
  %v187 = vsel %vm53, %v182, %v186
  %v188 = vshrl.u32 %v34, 16
  %v190 = vrot.slane %v188, 4
  %v191 = vor.u32 %v190, %v186
  %v192 = vrot.slane %v191, 4
  %v194 = vshll.u32 %v48, 16
  %v196 = vrot.slane %v194, 5
  %v197 = vsel %vm53, %v192, %v196
  %v199 = vshrl.u32 %v35, 16
  %v201 = vrot.slane %v199, 4
  %v202 = vshll.u32 %v35, 16
  %v204 = vrot.slane %v202, 5
  %v205 = vor.u32 %v201, %v204
  %v206 = vrot.slane %v205, 4
  %v208 = vshll.u32 %v36, 16
  %v210 = vrot.slane %v208, 5
  %v211 = vsel %vm53, %v206, %v210
  %v212 = vshrl.u32 %v36, 16
  %v214 = vrot.slane %v212, 4
  %v215 = vor.u32 %v214, %v210
  %v216 = vrot.slane %v215, 4
  %v218 = vshll.u32 %v49, 16
  %v220 = vrot.slane %v218, 5
  %v221 = vsel %vm53, %v216, %v220
  %v223 = vshrl.u32 %v37, 16
  %v225 = vrot.slane %v223, 4
  %v226 = vshll.u32 %v37, 16
  %v228 = vrot.slane %v226, 5
  %v229 = vor.u32 %v225, %v228
  %v230 = vrot.slane %v229, 4
  %v232 = vshll.u32 %v38, 16
  %v234 = vrot.slane %v232, 5
  %v235 = vsel %vm53, %v230, %v234
  %v236 = vshrl.u32 %v38, 16
  %v238 = vrot.slane %v236, 4
  %v239 = vor.u32 %v238, %v234
  %v240 = vrot.slane %v239, 4
  %v242 = vshll.u32 %v50, 16
  %v244 = vrot.slane %v242, 5
  %v245 = vsel %vm53, %v240, %v244
  %s246 = scalar_lea.vmem %s1, 16
  %v247 = vld [vmem:[%s246] sm:$0xf]
  %v248 = vld [vmem:[%s246 + $0x4] sm:$0xf]
  %v249 = vld [vmem:[%s246 + $0x8] sm:$0xf]
  %v250 = vld [vmem:[%s246 + $0xc] sm:$0xf]
  %v251 = vunpack.c.l.b16 %v67
  %v252 = vunpack.c.l.b16 %v77
  %v253 = vunpack.c.l.b16 %v91
  %v254 = vunpack.c.l.b16 %v101
  %v255 = vunpack.c.l.b16 %v115
  %v256 = vunpack.c.l.b16 %v125
  %v257 = vunpack.c.l.b16 %v139
  %v258 = vunpack.c.l.b16 %v149
  %v259 = vunpack.c.l.b16 %v163
  %v260 = vunpack.c.l.b16 %v173
  %v261 = vunpack.c.l.b16 %v187
  %v262 = vunpack.c.l.b16 %v197
  %v263 = vunpack.c.l.b16 %v211
  %v264 = vunpack.c.l.b16 %v221
  %v265 = vunpack.c.l.b16 %v235
  %v266 = vunpack.c.l.b16 %v245
  %v267 = vpack.c.b16 %v252, %v251
  %v268 = vpack.c.b16 %v254, %v253
  %v269 = vpack.c.b16 %v256, %v255
  %v270 = vpack.c.b16 %v258, %v257
  %v271 = vpack.c.b16 %v260, %v259
  %v272 = vpack.c.b16 %v262, %v261
  %v273 = vpack.c.b16 %v264, %v263
  %v274 = vpack.c.b16 %v266, %v265
  %v279 = vunpack.c.l.b16 %v247
  %v280 = vunpack.c.l.b16 %v248
  %v281 = vunpack.c.l.b16 %v249
  %v282 = vunpack.c.l.b16 %v250
  %v283 = vpack.c.b16 %v280, %v279
  %v284 = vpack.c.b16 %v282, %v281
  %vm287 = vcmask 261120
  %v289 = vsel %vm287, %v267, 0
  %v292 = vsel %vm287, %v268, 0
  %v295 = vsel %vm287, %v269, 0
  %v298 = vsel %vm287, %v270, 0
  %v301 = vsel %vm287, %v271, 0
  %v304 = vsel %vm287, %v272, 0
  %v307 = vsel %vm287, %v273, 0
  %v310 = vsel %vm287, %v274, 0
  %312 = vmatprep.subr.bf16.mxu0 0
  %313 = vmatpush1.bf16.msra.mxu0 0
  %314 = vmatprep.subr.bf16.mxu0 0
  %315 = vmatpush1.bf16.msra.mxu0 0
  %316 = vmatprep.subr.bf16.mxu0 0
  %317 = vmatpush1.bf16.msra.mxu0 0
  %318 = vmatprep.subr.bf16.mxu0 0
  %319 = vmatpush1.bf16.msra.mxu0 0
  %320 = vmatprep.subr.bf16.mxu0 0
  %321 = vmatpush1.bf16.msra.mxu0 0
  %322 = vmatprep.subr.bf16.mxu0 0
  %323 = vmatpush1.bf16.msra.mxu0 0
  %324 = vmatprep.subr.bf16.mxu0 0
  %325 = vmatpush1.bf16.msra.mxu0 %v284
  %326 = vmatprep.subr.bf16.mxu0 0
  %327 = vmatpush1.bf16.msra.mxu0 %v283
  %328 = vmatprep.subr.bf16.mxu0 0
  %329 = vmatpush2.bf16.msra.mxu0 0
  %330 = vmatprep.subr.bf16.mxu0 0
  %331 = vmatpush2.bf16.msra.mxu0 0
  %332 = vmatprep.subr.bf16.mxu0 0
  %333 = vmatpush2.bf16.msra.mxu0 0
  %334 = vmatprep.subr.bf16.mxu0 0
  %335 = vmatpush2.bf16.msra.mxu0 0
  %336 = vmatprep.subr.bf16.mxu0 0
  %337 = vmatpush2.bf16.msra.mxu0 0
  %338 = vmatprep.subr.bf16.mxu0 0
  %339 = vmatpush2.bf16.msra.mxu0 0
  %340 = vmatprep.subr.bf16.mxu0 0
  %341 = vmatpush2.bf16.msra.mxu0 0
  %342 = vmatprep.subr.bf16.mxu0 0
  %343 = vmatpush2.bf16.msra.mxu0 0
  %344 = vmatprep.mubr.bf16.mxu0 0
  %345 = vmatmul.mubr.bf16.gmra.mxu0 %v289
  %v346 = vpop.f32.mrf.mxu0
  %v347 = vadd.f32 0.0, %v346
  %v348 = vpop.f32.mrf.mxu0
  %v349 = vpop.f32.mrf.mxu0
  %v350 = vadd.f32 0.0, %v349
  %v351 = vpop.f32.mrf.mxu0
  %352 = vmatprep.mubr.bf16.mxu0 0
  %353 = vmatmul.mubr.bf16.gmra.mxu0 %v292
  %v354 = vpop.f32.mrf.mxu0
  %v355 = vadd.f32 0.0, %v354
  %v356 = vpop.f32.mrf.mxu0
  %v357 = vpop.f32.mrf.mxu0
  %v358 = vadd.f32 0.0, %v357
  %v359 = vpop.f32.mrf.mxu0
  %360 = vmatprep.mubr.bf16.mxu0 0
  %361 = vmatmul.mubr.bf16.gmra.mxu0 %v295
  %v362 = vpop.f32.mrf.mxu0
  %v363 = vadd.f32 0.0, %v362
  %v364 = vpop.f32.mrf.mxu0
  %v365 = vpop.f32.mrf.mxu0
  %v366 = vadd.f32 0.0, %v365
  %v367 = vpop.f32.mrf.mxu0
  %368 = vmatprep.mubr.bf16.mxu0 0
  %369 = vmatmul.mubr.bf16.gmra.mxu0 %v298
  %v370 = vpop.f32.mrf.mxu0
  %v371 = vadd.f32 0.0, %v370
  %v372 = vpop.f32.mrf.mxu0
  %v373 = vpop.f32.mrf.mxu0
  %v374 = vadd.f32 0.0, %v373
  %v375 = vpop.f32.mrf.mxu0
  %376 = vmatprep.mubr.bf16.mxu0 0
  %377 = vmatmul.mubr.bf16.gmra.mxu0 %v301
  %v378 = vpop.f32.mrf.mxu0
  %v379 = vadd.f32 0.0, %v378
  %v380 = vpop.f32.mrf.mxu0
  %v381 = vpop.f32.mrf.mxu0
  %v382 = vadd.f32 0.0, %v381
  %v383 = vpop.f32.mrf.mxu0
  %384 = vmatprep.mubr.bf16.mxu0 0
  %385 = vmatmul.mubr.bf16.gmra.mxu0 %v304
  %v386 = vpop.f32.mrf.mxu0
  %v387 = vadd.f32 0.0, %v386
  %v388 = vpop.f32.mrf.mxu0
  %v389 = vpop.f32.mrf.mxu0
  %v390 = vadd.f32 0.0, %v389
  %v391 = vpop.f32.mrf.mxu0
  %392 = vmatprep.mubr.bf16.mxu0 0
  %393 = vmatmul.mubr.bf16.gmra.mxu0 %v307
  %v394 = vpop.f32.mrf.mxu0
  %v395 = vadd.f32 0.0, %v394
  %v396 = vpop.f32.mrf.mxu0
  %v397 = vpop.f32.mrf.mxu0
  %v398 = vadd.f32 0.0, %v397
  %v399 = vpop.f32.mrf.mxu0
  %400 = vmatprep.mubr.bf16.mxu0 0
  %401 = vmatmul.mubr.bf16.gmra.mxu0 %v310
  %v402 = vpop.f32.mrf.mxu0
  %v403 = vadd.f32 0.0, %v402
  %v404 = vpop.f32.mrf.mxu0
  %v405 = vpop.f32.mrf.mxu0
  %v406 = vadd.f32 0.0, %v405
  %v407 = vpop.f32.mrf.mxu0
  %408 = vdwg.mxu0
  %v425 = vunpack.c.l.b16 %v23
  %v426 = vunpack.c.l.b16 %v24
  %v427 = vunpack.c.l.b16 %v25
  %v428 = vunpack.c.l.b16 %v26
  %v429 = vunpack.c.l.b16 %v27
  %v430 = vunpack.c.l.b16 %v28
  %v431 = vunpack.c.l.b16 %v29
  %v432 = vunpack.c.l.b16 %v30
  %v433 = vunpack.c.l.b16 %v31
  %v434 = vunpack.c.l.b16 %v32
  %v435 = vunpack.c.l.b16 %v33
  %v436 = vunpack.c.l.b16 %v34
  %v437 = vunpack.c.l.b16 %v35
  %v438 = vunpack.c.l.b16 %v36
  %v439 = vunpack.c.l.b16 %v37
  %v440 = vunpack.c.l.b16 %v38
  %v441 = vpack.c.b16 %v426, %v425
  %v442 = vpack.c.b16 %v428, %v427
  %v443 = vpack.c.b16 %v430, %v429
  %v444 = vpack.c.b16 %v432, %v431
  %v445 = vpack.c.b16 %v434, %v433
  %v446 = vpack.c.b16 %v436, %v435
  %v447 = vpack.c.b16 %v438, %v437
  %v448 = vpack.c.b16 %v440, %v439
  %v453 = vunpack.c.l.b16 %v39
  %v454 = vunpack.c.l.b16 %v40
  %v455 = vunpack.c.l.b16 %v41
  %v456 = vunpack.c.l.b16 %v42
  %v457 = vpack.c.b16 %v454, %v453
  %v458 = vpack.c.b16 %v456, %v455
  %v462 = vsel %vm287, %v441, 0
  %v465 = vsel %vm287, %v442, 0
  %v468 = vsel %vm287, %v443, 0
  %v471 = vsel %vm287, %v444, 0
  %v474 = vsel %vm287, %v445, 0
  %v477 = vsel %vm287, %v446, 0
  %v480 = vsel %vm287, %v447, 0
  %v483 = vsel %vm287, %v448, 0
  %485 = vmatprep.subr.bf16.mxu0 0
  %486 = vmatpush1.bf16.msra.mxu0 0
  %487 = vmatprep.subr.bf16.mxu0 0
  %488 = vmatpush1.bf16.msra.mxu0 0
  %489 = vmatprep.subr.bf16.mxu0 0
  %490 = vmatpush1.bf16.msra.mxu0 0
  %491 = vmatprep.subr.bf16.mxu0 0
  %492 = vmatpush1.bf16.msra.mxu0 0
  %493 = vmatprep.subr.bf16.mxu0 0
  %494 = vmatpush1.bf16.msra.mxu0 0
  %495 = vmatprep.subr.bf16.mxu0 0
  %496 = vmatpush1.bf16.msra.mxu0 0
  %497 = vmatprep.subr.bf16.mxu0 0
  %498 = vmatpush1.bf16.msra.mxu0 %v458
  %499 = vmatprep.subr.bf16.mxu0 0
  %500 = vmatpush1.bf16.msra.mxu0 %v457
  %501 = vmatprep.subr.bf16.mxu0 0
  %502 = vmatpush2.bf16.msra.mxu0 0
  %503 = vmatprep.subr.bf16.mxu0 0
  %504 = vmatpush2.bf16.msra.mxu0 0
  %505 = vmatprep.subr.bf16.mxu0 0
  %506 = vmatpush2.bf16.msra.mxu0 0
  %507 = vmatprep.subr.bf16.mxu0 0
  %508 = vmatpush2.bf16.msra.mxu0 0
  %509 = vmatprep.subr.bf16.mxu0 0
  %510 = vmatpush2.bf16.msra.mxu0 0
  %511 = vmatprep.subr.bf16.mxu0 0
  %512 = vmatpush2.bf16.msra.mxu0 0
  %513 = vmatprep.subr.bf16.mxu0 0
  %514 = vmatpush2.bf16.msra.mxu0 0
  %515 = vmatprep.subr.bf16.mxu0 0
  %516 = vmatpush2.bf16.msra.mxu0 0
  %517 = vmatprep.mubr.bf16.mxu0 0
  %518 = vmatmul.mubr.bf16.gmra.mxu0 %v462
  %v519 = vpop.f32.mrf.mxu0
  %v520 = vadd.f32 %v347, %v519
  %v521 = vpop.f32.mrf.mxu0
  %v522 = vpop.f32.mrf.mxu0
  %v523 = vadd.f32 %v350, %v522
  %v524 = vpop.f32.mrf.mxu0
  %525 = vmatprep.mubr.bf16.mxu0 0
  %526 = vmatmul.mubr.bf16.gmra.mxu0 %v465
  %v527 = vpop.f32.mrf.mxu0
  %v528 = vadd.f32 %v355, %v527
  %v529 = vpop.f32.mrf.mxu0
  %v530 = vpop.f32.mrf.mxu0
  %v531 = vadd.f32 %v358, %v530
  %v532 = vpop.f32.mrf.mxu0
  %533 = vmatprep.mubr.bf16.mxu0 0
  %534 = vmatmul.mubr.bf16.gmra.mxu0 %v468
  %v535 = vpop.f32.mrf.mxu0
  %v536 = vadd.f32 %v363, %v535
  %v537 = vpop.f32.mrf.mxu0
  %v538 = vpop.f32.mrf.mxu0
  %v539 = vadd.f32 %v366, %v538
  %v540 = vpop.f32.mrf.mxu0
  %541 = vmatprep.mubr.bf16.mxu0 0
  %542 = vmatmul.mubr.bf16.gmra.mxu0 %v471
  %v543 = vpop.f32.mrf.mxu0
  %v544 = vadd.f32 %v371, %v543
  %v545 = vpop.f32.mrf.mxu0
  %v546 = vpop.f32.mrf.mxu0
  %v547 = vadd.f32 %v374, %v546
  %v548 = vpop.f32.mrf.mxu0
  %549 = vmatprep.mubr.bf16.mxu0 0
  %550 = vmatmul.mubr.bf16.gmra.mxu0 %v474
  %v551 = vpop.f32.mrf.mxu0
  %v552 = vadd.f32 %v379, %v551
  %v553 = vpop.f32.mrf.mxu0
  %v554 = vpop.f32.mrf.mxu0
  %v555 = vadd.f32 %v382, %v554
  %v556 = vpop.f32.mrf.mxu0
  %557 = vmatprep.mubr.bf16.mxu0 0
  %558 = vmatmul.mubr.bf16.gmra.mxu0 %v477
  %v559 = vpop.f32.mrf.mxu0
  %v560 = vadd.f32 %v387, %v559
  %v561 = vpop.f32.mrf.mxu0
  %v562 = vpop.f32.mrf.mxu0
  %v563 = vadd.f32 %v390, %v562
  %v564 = vpop.f32.mrf.mxu0
  %565 = vmatprep.mubr.bf16.mxu0 0
  %566 = vmatmul.mubr.bf16.gmra.mxu0 %v480
  %v567 = vpop.f32.mrf.mxu0
  %v568 = vadd.f32 %v395, %v567
  %v569 = vpop.f32.mrf.mxu0
  %v570 = vpop.f32.mrf.mxu0
  %v571 = vadd.f32 %v398, %v570
  %v572 = vpop.f32.mrf.mxu0
  %573 = vmatprep.mubr.bf16.mxu0 0
  %574 = vmatmul.mubr.bf16.gmra.mxu0 %v483
  %v575 = vpop.f32.mrf.mxu0
  %v576 = vadd.f32 %v403, %v575
  %v577 = vpop.f32.mrf.mxu0
  %v578 = vpop.f32.mrf.mxu0
  %v579 = vadd.f32 %v406, %v578
  %v580 = vpop.f32.mrf.mxu0
  %581 = vdwg.mxu0
  %v582 = vld [vmem:[%s0] sm:$0xe]
  %v583 = vld [vmem:[%s0 + $0x10] sm:$0xe]
  %v584 = vld [vmem:[%s0 + $0x20] sm:$0xe]
  %v585 = vld [vmem:[%s0 + $0x30] sm:$0xe]
  %v586 = vld [vmem:[%s0 + $0x40] sm:$0xe]
  %v587 = vld [vmem:[%s0 + $0x50] sm:$0xe]
  %v588 = vld [vmem:[%s0 + $0x60] sm:$0xe]
  %v589 = vld [vmem:[%s0 + $0x70] sm:$0xe]
  %vm606 = vcmask 1042432
  %vm607 = vcmask 1046532
  %vm608 = vmor %vm606, %vm607
  %v609 = vrot.slane %v582, 5
  %v610 = vrot.slane %v609, 4
  %v611 = vrot.slane %v24, 5
  %v612 = vsel %vm608, %v610, %v611
  %v613 = vrot.slane %v611, 4
  %v614 = vrot.slane %v43, 5
  %v615 = vsel %vm608, %v613, %v614
  %v616 = vrot.slane %v583, 5
  %v617 = vrot.slane %v616, 4
  %v618 = vrot.slane %v26, 5
  %v619 = vsel %vm608, %v617, %v618
  %v620 = vrot.slane %v618, 4
  %v621 = vrot.slane %v44, 5
  %v622 = vsel %vm608, %v620, %v621
  %v623 = vrot.slane %v584, 5
  %v624 = vrot.slane %v623, 4
  %v625 = vrot.slane %v28, 5
  %v626 = vsel %vm608, %v624, %v625
  %v627 = vrot.slane %v625, 4
  %v628 = vrot.slane %v45, 5
  %v629 = vsel %vm608, %v627, %v628
  %v630 = vrot.slane %v585, 5
  %v631 = vrot.slane %v630, 4
  %v632 = vrot.slane %v30, 5
  %v633 = vsel %vm608, %v631, %v632
  %v634 = vrot.slane %v632, 4
  %v635 = vrot.slane %v46, 5
  %v636 = vsel %vm608, %v634, %v635
  %v637 = vrot.slane %v586, 5
  %v638 = vrot.slane %v637, 4
  %v639 = vrot.slane %v32, 5
  %v640 = vsel %vm608, %v638, %v639
  %v641 = vrot.slane %v639, 4
  %v642 = vrot.slane %v47, 5
  %v643 = vsel %vm608, %v641, %v642
  %v644 = vrot.slane %v587, 5
  %v645 = vrot.slane %v644, 4
  %v646 = vrot.slane %v34, 5
  %v647 = vsel %vm608, %v645, %v646
  %v648 = vrot.slane %v646, 4
  %v649 = vrot.slane %v48, 5
  %v650 = vsel %vm608, %v648, %v649
  %v651 = vrot.slane %v588, 5
  %v652 = vrot.slane %v651, 4
  %v653 = vrot.slane %v36, 5
  %v654 = vsel %vm608, %v652, %v653
  %v655 = vrot.slane %v653, 4
  %v656 = vrot.slane %v49, 5
  %v657 = vsel %vm608, %v655, %v656
  %v658 = vrot.slane %v589, 5
  %v659 = vrot.slane %v658, 4
  %v660 = vrot.slane %v38, 5
  %v661 = vsel %vm608, %v659, %v660
  %v662 = vrot.slane %v660, 4
  %v663 = vrot.slane %v50, 5
  %v664 = vsel %vm608, %v662, %v663
  %s665 = scalar_lea.vmem %s1, 32
  %v666 = vld [vmem:[%s665] sm:$0xf]
  %v667 = vld [vmem:[%s665 + $0x4] sm:$0xf]
  %v668 = vld [vmem:[%s665 + $0x8] sm:$0xf]
  %v669 = vld [vmem:[%s665 + $0xc] sm:$0xf]
  %v670 = vunpack.c.l.b16 %v612
  %v671 = vunpack.c.l.b16 %v615
  %v672 = vunpack.c.l.b16 %v619
  %v673 = vunpack.c.l.b16 %v622
  %v674 = vunpack.c.l.b16 %v626
  %v675 = vunpack.c.l.b16 %v629
  %v676 = vunpack.c.l.b16 %v633
  %v677 = vunpack.c.l.b16 %v636
  %v678 = vunpack.c.l.b16 %v640
  %v679 = vunpack.c.l.b16 %v643
  %v680 = vunpack.c.l.b16 %v647
  %v681 = vunpack.c.l.b16 %v650
  %v682 = vunpack.c.l.b16 %v654
  %v683 = vunpack.c.l.b16 %v657
  %v684 = vunpack.c.l.b16 %v661
  %v685 = vunpack.c.l.b16 %v664
  %v686 = vpack.c.b16 %v671, %v670
  %v687 = vpack.c.b16 %v673, %v672
  %v688 = vpack.c.b16 %v675, %v674
  %v689 = vpack.c.b16 %v677, %v676
  %v690 = vpack.c.b16 %v679, %v678
  %v691 = vpack.c.b16 %v681, %v680
  %v692 = vpack.c.b16 %v683, %v682
  %v693 = vpack.c.b16 %v685, %v684
  %v698 = vunpack.c.l.b16 %v666
  %v699 = vunpack.c.l.b16 %v667
  %v700 = vunpack.c.l.b16 %v668
  %v701 = vunpack.c.l.b16 %v669
  %v702 = vpack.c.b16 %v699, %v698
  %v703 = vpack.c.b16 %v701, %v700
  %v707 = vsel %vm287, %v686, 0
  %v710 = vsel %vm287, %v687, 0
  %v713 = vsel %vm287, %v688, 0
  %v716 = vsel %vm287, %v689, 0
  %v719 = vsel %vm287, %v690, 0
  %v722 = vsel %vm287, %v691, 0
  %v725 = vsel %vm287, %v692, 0
  %v728 = vsel %vm287, %v693, 0
  %730 = vmatprep.subr.bf16.mxu0 0
  %731 = vmatpush1.bf16.msra.mxu0 0
  %732 = vmatprep.subr.bf16.mxu0 0
  %733 = vmatpush1.bf16.msra.mxu0 0
  %734 = vmatprep.subr.bf16.mxu0 0
  %735 = vmatpush1.bf16.msra.mxu0 0
  %736 = vmatprep.subr.bf16.mxu0 0
  %737 = vmatpush1.bf16.msra.mxu0 0
  %738 = vmatprep.subr.bf16.mxu0 0
  %739 = vmatpush1.bf16.msra.mxu0 0
  %740 = vmatprep.subr.bf16.mxu0 0
  %741 = vmatpush1.bf16.msra.mxu0 0
  %742 = vmatprep.subr.bf16.mxu0 0
  %743 = vmatpush1.bf16.msra.mxu0 %v703
  %744 = vmatprep.subr.bf16.mxu0 0
  %745 = vmatpush1.bf16.msra.mxu0 %v702
  %746 = vmatprep.subr.bf16.mxu0 0
  %747 = vmatpush2.bf16.msra.mxu0 0
  %748 = vmatprep.subr.bf16.mxu0 0
  %749 = vmatpush2.bf16.msra.mxu0 0
  %750 = vmatprep.subr.bf16.mxu0 0
  %751 = vmatpush2.bf16.msra.mxu0 0
  %752 = vmatprep.subr.bf16.mxu0 0
  %753 = vmatpush2.bf16.msra.mxu0 0
  %754 = vmatprep.subr.bf16.mxu0 0
  %755 = vmatpush2.bf16.msra.mxu0 0
  %756 = vmatprep.subr.bf16.mxu0 0
  %757 = vmatpush2.bf16.msra.mxu0 0
  %758 = vmatprep.subr.bf16.mxu0 0
  %759 = vmatpush2.bf16.msra.mxu0 0
  %760 = vmatprep.subr.bf16.mxu0 0
  %761 = vmatpush2.bf16.msra.mxu0 0
  %762 = vmatprep.mubr.bf16.mxu0 0
  %763 = vmatmul.mubr.bf16.gmra.mxu0 %v707
  %v764 = vpop.f32.mrf.mxu0
  %v765 = vadd.f32 0.0, %v764
  %v766 = vpop.f32.mrf.mxu0
  %v767 = vpop.f32.mrf.mxu0
  %v768 = vadd.f32 0.0, %v767
  %v769 = vpop.f32.mrf.mxu0
  %770 = vmatprep.mubr.bf16.mxu0 0
  %771 = vmatmul.mubr.bf16.gmra.mxu0 %v710
  %v772 = vpop.f32.mrf.mxu0
  %v773 = vadd.f32 0.0, %v772
  %v774 = vpop.f32.mrf.mxu0
  %v775 = vpop.f32.mrf.mxu0
  %v776 = vadd.f32 0.0, %v775
  %v777 = vpop.f32.mrf.mxu0
  %778 = vmatprep.mubr.bf16.mxu0 0
  %779 = vmatmul.mubr.bf16.gmra.mxu0 %v713
  %v780 = vpop.f32.mrf.mxu0
  %v781 = vadd.f32 0.0, %v780
  %v782 = vpop.f32.mrf.mxu0
  %v783 = vpop.f32.mrf.mxu0
  %v784 = vadd.f32 0.0, %v783
  %v785 = vpop.f32.mrf.mxu0
  %786 = vmatprep.mubr.bf16.mxu0 0
  %787 = vmatmul.mubr.bf16.gmra.mxu0 %v716
  %v788 = vpop.f32.mrf.mxu0
  %v789 = vadd.f32 0.0, %v788
  %v790 = vpop.f32.mrf.mxu0
  %v791 = vpop.f32.mrf.mxu0
  %v792 = vadd.f32 0.0, %v791
  %v793 = vpop.f32.mrf.mxu0
  %794 = vmatprep.mubr.bf16.mxu0 0
  %795 = vmatmul.mubr.bf16.gmra.mxu0 %v719
  %v796 = vpop.f32.mrf.mxu0
  %v797 = vadd.f32 0.0, %v796
  %v798 = vpop.f32.mrf.mxu0
  %v799 = vpop.f32.mrf.mxu0
  %v800 = vadd.f32 0.0, %v799
  %v801 = vpop.f32.mrf.mxu0
  %802 = vmatprep.mubr.bf16.mxu0 0
  %803 = vmatmul.mubr.bf16.gmra.mxu0 %v722
  %v804 = vpop.f32.mrf.mxu0
  %v805 = vadd.f32 0.0, %v804
  %v806 = vpop.f32.mrf.mxu0
  %v807 = vpop.f32.mrf.mxu0
  %v808 = vadd.f32 0.0, %v807
  %v809 = vpop.f32.mrf.mxu0
  %810 = vmatprep.mubr.bf16.mxu0 0
  %811 = vmatmul.mubr.bf16.gmra.mxu0 %v725
  %v812 = vpop.f32.mrf.mxu0
  %v813 = vadd.f32 0.0, %v812
  %v814 = vpop.f32.mrf.mxu0
  %v815 = vpop.f32.mrf.mxu0
  %v816 = vadd.f32 0.0, %v815
  %v817 = vpop.f32.mrf.mxu0
  %818 = vmatprep.mubr.bf16.mxu0 0
  %819 = vmatmul.mubr.bf16.gmra.mxu0 %v728
  %v820 = vpop.f32.mrf.mxu0
  %v821 = vadd.f32 0.0, %v820
  %v822 = vpop.f32.mrf.mxu0
  %v823 = vpop.f32.mrf.mxu0
  %v824 = vadd.f32 0.0, %v823
  %v825 = vpop.f32.mrf.mxu0
  %826 = vdwg.mxu0
  %v827 = vadd.f32 %v520, %v765
  %v828 = vadd.f32 %v523, %v768
  %v829 = vadd.f32 %v528, %v773
  %v830 = vadd.f32 %v531, %v776
  %v831 = vadd.f32 %v536, %v781
  %v832 = vadd.f32 %v539, %v784
  %v833 = vadd.f32 %v544, %v789
  %v834 = vadd.f32 %v547, %v792
  %v835 = vadd.f32 %v552, %v797
  %v836 = vadd.f32 %v555, %v800
  %v837 = vadd.f32 %v560, %v805
  %v838 = vadd.f32 %v563, %v808
  %v839 = vadd.f32 %v568, %v813
  %v840 = vadd.f32 %v571, %v816
  %v841 = vadd.f32 %v576, %v821
  %v842 = vadd.f32 %v579, %v824
  %v843 = vld [vmem:[%s0 + $0x8] sm:$0x3]
  %v844 = vld [vmem:[%s0 + $0x18] sm:$0x3]
  %v845 = vld [vmem:[%s0 + $0x28] sm:$0x3]
  %v846 = vld [vmem:[%s0 + $0x38] sm:$0x3]
  %v847 = vld [vmem:[%s0 + $0x48] sm:$0x3]
  %v848 = vld [vmem:[%s0 + $0x58] sm:$0x3]
  %v849 = vld [vmem:[%s0 + $0x68] sm:$0x3]
  %v850 = vld [vmem:[%s0 + $0x78] sm:$0x3]
  %vm851 = vsmask.f32 2304
  %vm852 = vsmask.f32 6416
  %vm853 = vmor %vm851, %vm852
  %v855 = vshrl.u32 %v582, 16
  %v857 = vrot.slane %v855, 5
  %v858 = vshll.u32 %v582, 16
  %v860 = vrot.slane %v858, 6
  %v861 = vor.u32 %v857, %v860
  %v862 = vrot.slane %v861, 4
  %v863 = vrot.slane %v68, 5
  %v864 = vrot.slane %v64, 6
  %v865 = vor.u32 %v863, %v864
  %v866 = vsel %vm853, %v862, %v865
  %v867 = vrot.slane %v865, 4
  %v869 = vshrl.u32 %v843, 16
  %v871 = vrot.slane %v869, 5
  %v872 = vshll.u32 %v843, 16
  %v874 = vrot.slane %v872, 6
  %v875 = vor.u32 %v871, %v874
  %v876 = vsel %vm853, %v867, %v875
  %v878 = vshrl.u32 %v583, 16
  %v880 = vrot.slane %v878, 5
  %v881 = vshll.u32 %v583, 16
  %v883 = vrot.slane %v881, 6
  %v884 = vor.u32 %v880, %v883
  %v885 = vrot.slane %v884, 4
  %v886 = vrot.slane %v92, 5
  %v887 = vrot.slane %v88, 6
  %v888 = vor.u32 %v886, %v887
  %v889 = vsel %vm853, %v885, %v888
  %v890 = vrot.slane %v888, 4
  %v892 = vshrl.u32 %v844, 16
  %v894 = vrot.slane %v892, 5
  %v895 = vshll.u32 %v844, 16
  %v897 = vrot.slane %v895, 6
  %v898 = vor.u32 %v894, %v897
  %v899 = vsel %vm853, %v890, %v898
  %v901 = vshrl.u32 %v584, 16
  %v903 = vrot.slane %v901, 5
  %v904 = vshll.u32 %v584, 16
  %v906 = vrot.slane %v904, 6
  %v907 = vor.u32 %v903, %v906
  %v908 = vrot.slane %v907, 4
  %v909 = vrot.slane %v116, 5
  %v910 = vrot.slane %v112, 6
  %v911 = vor.u32 %v909, %v910
  %v912 = vsel %vm853, %v908, %v911
  %v913 = vrot.slane %v911, 4
  %v915 = vshrl.u32 %v845, 16
  %v917 = vrot.slane %v915, 5
  %v918 = vshll.u32 %v845, 16
  %v920 = vrot.slane %v918, 6
  %v921 = vor.u32 %v917, %v920
  %v922 = vsel %vm853, %v913, %v921
  %v924 = vshrl.u32 %v585, 16
  %v926 = vrot.slane %v924, 5
  %v927 = vshll.u32 %v585, 16
  %v929 = vrot.slane %v927, 6
  %v930 = vor.u32 %v926, %v929
  %v931 = vrot.slane %v930, 4
  %v932 = vrot.slane %v140, 5
  %v933 = vrot.slane %v136, 6
  %v934 = vor.u32 %v932, %v933
  %v935 = vsel %vm853, %v931, %v934
  %v936 = vrot.slane %v934, 4
  %v938 = vshrl.u32 %v846, 16
  %v940 = vrot.slane %v938, 5
  %v941 = vshll.u32 %v846, 16
  %v943 = vrot.slane %v941, 6
  %v944 = vor.u32 %v940, %v943
  %v945 = vsel %vm853, %v936, %v944
  %v947 = vshrl.u32 %v586, 16
  %v949 = vrot.slane %v947, 5
  %v950 = vshll.u32 %v586, 16
  %v952 = vrot.slane %v950, 6
  %v953 = vor.u32 %v949, %v952
  %v954 = vrot.slane %v953, 4
  %v955 = vrot.slane %v164, 5
  %v956 = vrot.slane %v160, 6
  %v957 = vor.u32 %v955, %v956
  %v958 = vsel %vm853, %v954, %v957
  %v959 = vrot.slane %v957, 4
  %v961 = vshrl.u32 %v847, 16
  %v963 = vrot.slane %v961, 5
  %v964 = vshll.u32 %v847, 16
  %v966 = vrot.slane %v964, 6
  %v967 = vor.u32 %v963, %v966
  %v968 = vsel %vm853, %v959, %v967
  %v970 = vshrl.u32 %v587, 16
  %v972 = vrot.slane %v970, 5
  %v973 = vshll.u32 %v587, 16
  %v975 = vrot.slane %v973, 6
  %v976 = vor.u32 %v972, %v975
  %v977 = vrot.slane %v976, 4
  %v978 = vrot.slane %v188, 5
  %v979 = vrot.slane %v184, 6
  %v980 = vor.u32 %v978, %v979
  %v981 = vsel %vm853, %v977, %v980
  %v982 = vrot.slane %v980, 4
  %v984 = vshrl.u32 %v848, 16
  %v986 = vrot.slane %v984, 5
  %v987 = vshll.u32 %v848, 16
  %v989 = vrot.slane %v987, 6
  %v990 = vor.u32 %v986, %v989
  %v991 = vsel %vm853, %v982, %v990
  %v993 = vshrl.u32 %v588, 16
  %v995 = vrot.slane %v993, 5
  %v996 = vshll.u32 %v588, 16
  %v998 = vrot.slane %v996, 6
  %v999 = vor.u32 %v995, %v998
  %v1000 = vrot.slane %v999, 4
  %v1001 = vrot.slane %v212, 5
  %v1002 = vrot.slane %v208, 6
  %v1003 = vor.u32 %v1001, %v1002
  %v1004 = vsel %vm853, %v1000, %v1003
  %v1005 = vrot.slane %v1003, 4
  %v1007 = vshrl.u32 %v849, 16
  %v1009 = vrot.slane %v1007, 5
  %v1010 = vshll.u32 %v849, 16
  %v1012 = vrot.slane %v1010, 6
  %v1013 = vor.u32 %v1009, %v1012
  %v1014 = vsel %vm853, %v1005, %v1013
  %v1016 = vshrl.u32 %v589, 16
  %v1018 = vrot.slane %v1016, 5
  %v1019 = vshll.u32 %v589, 16
  %v1021 = vrot.slane %v1019, 6
  %v1022 = vor.u32 %v1018, %v1021
  %v1023 = vrot.slane %v1022, 4
  %v1024 = vrot.slane %v236, 5
  %v1025 = vrot.slane %v232, 6
  %v1026 = vor.u32 %v1024, %v1025
  %v1027 = vsel %vm853, %v1023, %v1026
  %v1028 = vrot.slane %v1026, 4
  %v1030 = vshrl.u32 %v850, 16
  %v1032 = vrot.slane %v1030, 5
  %v1033 = vshll.u32 %v850, 16
  %v1035 = vrot.slane %v1033, 6
  %v1036 = vor.u32 %v1032, %v1035
  %v1037 = vsel %vm853, %v1028, %v1036
  %s1038 = scalar_lea.vmem %s1, 48
  %v1039 = vld [vmem:[%s1038] sm:$0xf]
  %v1040 = vld [vmem:[%s1038 + $0x4] sm:$0xf]
  %v1041 = vld [vmem:[%s1038 + $0x8] sm:$0xf]
  %v1042 = vld [vmem:[%s1038 + $0xc] sm:$0xf]
  %v1043 = vunpack.c.l.b16 %v866
  %v1044 = vunpack.c.l.b16 %v876
  %v1045 = vunpack.c.l.b16 %v889
  %v1046 = vunpack.c.l.b16 %v899
  %v1047 = vunpack.c.l.b16 %v912
  %v1048 = vunpack.c.l.b16 %v922
  %v1049 = vunpack.c.l.b16 %v935
  %v1050 = vunpack.c.l.b16 %v945
  %v1051 = vunpack.c.l.b16 %v958
  %v1052 = vunpack.c.l.b16 %v968
  %v1053 = vunpack.c.l.b16 %v981
  %v1054 = vunpack.c.l.b16 %v991
  %v1055 = vunpack.c.l.b16 %v1004
  %v1056 = vunpack.c.l.b16 %v1014
  %v1057 = vunpack.c.l.b16 %v1027
  %v1058 = vunpack.c.l.b16 %v1037
  %v1059 = vpack.c.b16 %v1044, %v1043
  %v1060 = vpack.c.b16 %v1046, %v1045
  %v1061 = vpack.c.b16 %v1048, %v1047
  %v1062 = vpack.c.b16 %v1050, %v1049
  %v1063 = vpack.c.b16 %v1052, %v1051
  %v1064 = vpack.c.b16 %v1054, %v1053
  %v1065 = vpack.c.b16 %v1056, %v1055
  %v1066 = vpack.c.b16 %v1058, %v1057
  %v1071 = vunpack.c.l.b16 %v1039
  %v1072 = vunpack.c.l.b16 %v1040
  %v1073 = vunpack.c.l.b16 %v1041
  %v1074 = vunpack.c.l.b16 %v1042
  %v1075 = vpack.c.b16 %v1072, %v1071
  %v1076 = vpack.c.b16 %v1074, %v1073
  %v1080 = vsel %vm287, %v1059, 0
  %v1083 = vsel %vm287, %v1060, 0
  %v1086 = vsel %vm287, %v1061, 0
  %v1089 = vsel %vm287, %v1062, 0
  %v1092 = vsel %vm287, %v1063, 0
  %v1095 = vsel %vm287, %v1064, 0
  %v1098 = vsel %vm287, %v1065, 0
  %v1101 = vsel %vm287, %v1066, 0
  %1103 = vmatprep.subr.bf16.mxu0 0
  %1104 = vmatpush1.bf16.msra.mxu0 0
  %1105 = vmatprep.subr.bf16.mxu0 0
  %1106 = vmatpush1.bf16.msra.mxu0 0
  %1107 = vmatprep.subr.bf16.mxu0 0
  %1108 = vmatpush1.bf16.msra.mxu0 0
  %1109 = vmatprep.subr.bf16.mxu0 0
  %1110 = vmatpush1.bf16.msra.mxu0 0
  %1111 = vmatprep.subr.bf16.mxu0 0
  %1112 = vmatpush1.bf16.msra.mxu0 0
  %1113 = vmatprep.subr.bf16.mxu0 0
  %1114 = vmatpush1.bf16.msra.mxu0 0
  %1115 = vmatprep.subr.bf16.mxu0 0
  %1116 = vmatpush1.bf16.msra.mxu0 %v1076
  %1117 = vmatprep.subr.bf16.mxu0 0
  %1118 = vmatpush1.bf16.msra.mxu0 %v1075
  %1119 = vmatprep.subr.bf16.mxu0 0
  %1120 = vmatpush2.bf16.msra.mxu0 0
  %1121 = vmatprep.subr.bf16.mxu0 0
  %1122 = vmatpush2.bf16.msra.mxu0 0
  %1123 = vmatprep.subr.bf16.mxu0 0
  %1124 = vmatpush2.bf16.msra.mxu0 0
  %1125 = vmatprep.subr.bf16.mxu0 0
  %1126 = vmatpush2.bf16.msra.mxu0 0
  %1127 = vmatprep.subr.bf16.mxu0 0
  %1128 = vmatpush2.bf16.msra.mxu0 0
  %1129 = vmatprep.subr.bf16.mxu0 0
  %1130 = vmatpush2.bf16.msra.mxu0 0
  %1131 = vmatprep.subr.bf16.mxu0 0
  %1132 = vmatpush2.bf16.msra.mxu0 0
  %1133 = vmatprep.subr.bf16.mxu0 0
  %1134 = vmatpush2.bf16.msra.mxu0 0
  %1135 = vmatprep.mubr.bf16.mxu0 0
  %1136 = vmatmul.mubr.bf16.gmra.mxu0 %v1080
  %v1137 = vpop.f32.mrf.mxu0
  %v1138 = vadd.f32 0.0, %v1137
  %v1139 = vpop.f32.mrf.mxu0
  %v1140 = vpop.f32.mrf.mxu0
  %v1141 = vadd.f32 0.0, %v1140
  %v1142 = vpop.f32.mrf.mxu0
  %1143 = vmatprep.mubr.bf16.mxu0 0
  %1144 = vmatmul.mubr.bf16.gmra.mxu0 %v1083
  %v1145 = vpop.f32.mrf.mxu0
  %v1146 = vadd.f32 0.0, %v1145
  %v1147 = vpop.f32.mrf.mxu0
  %v1148 = vpop.f32.mrf.mxu0
  %v1149 = vadd.f32 0.0, %v1148
  %v1150 = vpop.f32.mrf.mxu0
  %1151 = vmatprep.mubr.bf16.mxu0 0
  %1152 = vmatmul.mubr.bf16.gmra.mxu0 %v1086
  %v1153 = vpop.f32.mrf.mxu0
  %v1154 = vadd.f32 0.0, %v1153
  %v1155 = vpop.f32.mrf.mxu0
  %v1156 = vpop.f32.mrf.mxu0
  %v1157 = vadd.f32 0.0, %v1156
  %v1158 = vpop.f32.mrf.mxu0
  %1159 = vmatprep.mubr.bf16.mxu0 0
  %1160 = vmatmul.mubr.bf16.gmra.mxu0 %v1089
  %v1161 = vpop.f32.mrf.mxu0
  %v1162 = vadd.f32 0.0, %v1161
  %v1163 = vpop.f32.mrf.mxu0
  %v1164 = vpop.f32.mrf.mxu0
  %v1165 = vadd.f32 0.0, %v1164
  %v1166 = vpop.f32.mrf.mxu0
  %1167 = vmatprep.mubr.bf16.mxu0 0
  %1168 = vmatmul.mubr.bf16.gmra.mxu0 %v1092
  %v1169 = vpop.f32.mrf.mxu0
  %v1170 = vadd.f32 0.0, %v1169
  %v1171 = vpop.f32.mrf.mxu0
  %v1172 = vpop.f32.mrf.mxu0
  %v1173 = vadd.f32 0.0, %v1172
  %v1174 = vpop.f32.mrf.mxu0
  %1175 = vmatprep.mubr.bf16.mxu0 0
  %1176 = vmatmul.mubr.bf16.gmra.mxu0 %v1095
  %v1177 = vpop.f32.mrf.mxu0
  %v1178 = vadd.f32 0.0, %v1177
  %v1179 = vpop.f32.mrf.mxu0
  %v1180 = vpop.f32.mrf.mxu0
  %v1181 = vadd.f32 0.0, %v1180
  %v1182 = vpop.f32.mrf.mxu0
  %1183 = vmatprep.mubr.bf16.mxu0 0
  %1184 = vmatmul.mubr.bf16.gmra.mxu0 %v1098
  %v1185 = vpop.f32.mrf.mxu0
  %v1186 = vadd.f32 0.0, %v1185
  %v1187 = vpop.f32.mrf.mxu0
  %v1188 = vpop.f32.mrf.mxu0
  %v1189 = vadd.f32 0.0, %v1188
  %v1190 = vpop.f32.mrf.mxu0
  %1191 = vmatprep.mubr.bf16.mxu0 0
  %1192 = vmatmul.mubr.bf16.gmra.mxu0 %v1101
  %v1193 = vpop.f32.mrf.mxu0
  %v1194 = vadd.f32 0.0, %v1193
  %v1195 = vpop.f32.mrf.mxu0
  %v1196 = vpop.f32.mrf.mxu0
  %v1197 = vadd.f32 0.0, %v1196
  %v1198 = vpop.f32.mrf.mxu0
  %1199 = vdwg.mxu0
  %v1200 = vadd.f32 %v827, %v1138
  %v1201 = vadd.f32 %v828, %v1141
  %v1202 = vadd.f32 %v829, %v1146
  %v1203 = vadd.f32 %v830, %v1149
  %v1204 = vadd.f32 %v831, %v1154
  %v1205 = vadd.f32 %v832, %v1157
  %v1206 = vadd.f32 %v833, %v1162
  %v1207 = vadd.f32 %v834, %v1165
  %v1208 = vadd.f32 %v835, %v1170
  %v1209 = vadd.f32 %v836, %v1173
  %v1210 = vadd.f32 %v837, %v1178
  %v1211 = vadd.f32 %v838, %v1181
  %v1212 = vadd.f32 %v839, %v1186
  %v1213 = vadd.f32 %v840, %v1189
  %v1214 = vadd.f32 %v841, %v1194
  %v1215 = vadd.f32 %v842, %v1197
  %v1216 = vld [vmem:[%s0] sm:$0xc]
  %v1217 = vld [vmem:[%s0 + $0x10] sm:$0xc]
  %v1218 = vld [vmem:[%s0 + $0x20] sm:$0xc]
  %v1219 = vld [vmem:[%s0 + $0x30] sm:$0xc]
  %v1220 = vld [vmem:[%s0 + $0x40] sm:$0xc]
  %v1221 = vld [vmem:[%s0 + $0x50] sm:$0xc]
  %v1222 = vld [vmem:[%s0 + $0x60] sm:$0xc]
  %v1223 = vld [vmem:[%s0 + $0x70] sm:$0xc]
  %vm1240 = vcmask 1041408
  %vm1241 = vcmask 1045508
  %vm1242 = vmor %vm1240, %vm1241
  %v1243 = vrot.slane %v1216, 6
  %v1244 = vrot.slane %v1243, 4
  %v1245 = vrot.slane %v24, 6
  %v1246 = vsel %vm1242, %v1244, %v1245
  %v1247 = vrot.slane %v1245, 4
  %v1248 = vrot.slane %v843, 6
  %v1249 = vsel %vm1242, %v1247, %v1248
  %v1250 = vrot.slane %v1217, 6
  %v1251 = vrot.slane %v1250, 4
  %v1252 = vrot.slane %v26, 6
  %v1253 = vsel %vm1242, %v1251, %v1252
  %v1254 = vrot.slane %v1252, 4
  %v1255 = vrot.slane %v844, 6
  %v1256 = vsel %vm1242, %v1254, %v1255
  %v1257 = vrot.slane %v1218, 6
  %v1258 = vrot.slane %v1257, 4
  %v1259 = vrot.slane %v28, 6
  %v1260 = vsel %vm1242, %v1258, %v1259
  %v1261 = vrot.slane %v1259, 4
  %v1262 = vrot.slane %v845, 6
  %v1263 = vsel %vm1242, %v1261, %v1262
  %v1264 = vrot.slane %v1219, 6
  %v1265 = vrot.slane %v1264, 4
  %v1266 = vrot.slane %v30, 6
  %v1267 = vsel %vm1242, %v1265, %v1266
  %v1268 = vrot.slane %v1266, 4
  %v1269 = vrot.slane %v846, 6
  %v1270 = vsel %vm1242, %v1268, %v1269
  %v1271 = vrot.slane %v1220, 6
  %v1272 = vrot.slane %v1271, 4
  %v1273 = vrot.slane %v32, 6
  %v1274 = vsel %vm1242, %v1272, %v1273
  %v1275 = vrot.slane %v1273, 4
  %v1276 = vrot.slane %v847, 6
  %v1277 = vsel %vm1242, %v1275, %v1276
  %v1278 = vrot.slane %v1221, 6
  %v1279 = vrot.slane %v1278, 4
  %v1280 = vrot.slane %v34, 6
  %v1281 = vsel %vm1242, %v1279, %v1280
  %v1282 = vrot.slane %v1280, 4
  %v1283 = vrot.slane %v848, 6
  %v1284 = vsel %vm1242, %v1282, %v1283
  %v1285 = vrot.slane %v1222, 6
  %v1286 = vrot.slane %v1285, 4
  %v1287 = vrot.slane %v36, 6
  %v1288 = vsel %vm1242, %v1286, %v1287
  %v1289 = vrot.slane %v1287, 4
  %v1290 = vrot.slane %v849, 6
  %v1291 = vsel %vm1242, %v1289, %v1290
  %v1292 = vrot.slane %v1223, 6
  %v1293 = vrot.slane %v1292, 4
  %v1294 = vrot.slane %v38, 6
  %v1295 = vsel %vm1242, %v1293, %v1294
  %v1296 = vrot.slane %v1294, 4
  %v1297 = vrot.slane %v850, 6
  %v1298 = vsel %vm1242, %v1296, %v1297
  %s1299 = scalar_lea.vmem %s1, 64
  %v1300 = vld [vmem:[%s1299] sm:$0xf]
  %v1301 = vld [vmem:[%s1299 + $0x4] sm:$0xf]
  %v1302 = vld [vmem:[%s1299 + $0x8] sm:$0xf]
  %v1303 = vld [vmem:[%s1299 + $0xc] sm:$0xf]
  %v1304 = vunpack.c.l.b16 %v1246
  %v1305 = vunpack.c.l.b16 %v1249
  %v1306 = vunpack.c.l.b16 %v1253
  %v1307 = vunpack.c.l.b16 %v1256
  %v1308 = vunpack.c.l.b16 %v1260
  %v1309 = vunpack.c.l.b16 %v1263
  %v1310 = vunpack.c.l.b16 %v1267
  %v1311 = vunpack.c.l.b16 %v1270
  %v1312 = vunpack.c.l.b16 %v1274
  %v1313 = vunpack.c.l.b16 %v1277
  %v1314 = vunpack.c.l.b16 %v1281
  %v1315 = vunpack.c.l.b16 %v1284
  %v1316 = vunpack.c.l.b16 %v1288
  %v1317 = vunpack.c.l.b16 %v1291
  %v1318 = vunpack.c.l.b16 %v1295
  %v1319 = vunpack.c.l.b16 %v1298
  %v1320 = vpack.c.b16 %v1305, %v1304
  %v1321 = vpack.c.b16 %v1307, %v1306
  %v1322 = vpack.c.b16 %v1309, %v1308
  %v1323 = vpack.c.b16 %v1311, %v1310
  %v1324 = vpack.c.b16 %v1313, %v1312
  %v1325 = vpack.c.b16 %v1315, %v1314
  %v1326 = vpack.c.b16 %v1317, %v1316
  %v1327 = vpack.c.b16 %v1319, %v1318
  %v1332 = vunpack.c.l.b16 %v1300
  %v1333 = vunpack.c.l.b16 %v1301
  %v1334 = vunpack.c.l.b16 %v1302
  %v1335 = vunpack.c.l.b16 %v1303
  %v1336 = vpack.c.b16 %v1333, %v1332
  %v1337 = vpack.c.b16 %v1335, %v1334
  %v1341 = vsel %vm287, %v1320, 0
  %v1344 = vsel %vm287, %v1321, 0
  %v1347 = vsel %vm287, %v1322, 0
  %v1350 = vsel %vm287, %v1323, 0
  %v1353 = vsel %vm287, %v1324, 0
  %v1356 = vsel %vm287, %v1325, 0
  %v1359 = vsel %vm287, %v1326, 0
  %v1362 = vsel %vm287, %v1327, 0
  %1364 = vmatprep.subr.bf16.mxu0 0
  %1365 = vmatpush1.bf16.msra.mxu0 0
  %1366 = vmatprep.subr.bf16.mxu0 0
  %1367 = vmatpush1.bf16.msra.mxu0 0
  %1368 = vmatprep.subr.bf16.mxu0 0
  %1369 = vmatpush1.bf16.msra.mxu0 0
  %1370 = vmatprep.subr.bf16.mxu0 0
  %1371 = vmatpush1.bf16.msra.mxu0 0
  %1372 = vmatprep.subr.bf16.mxu0 0
  %1373 = vmatpush1.bf16.msra.mxu0 0
  %1374 = vmatprep.subr.bf16.mxu0 0
  %1375 = vmatpush1.bf16.msra.mxu0 0
  %1376 = vmatprep.subr.bf16.mxu0 0
  %1377 = vmatpush1.bf16.msra.mxu0 %v1337
  %1378 = vmatprep.subr.bf16.mxu0 0
  %1379 = vmatpush1.bf16.msra.mxu0 %v1336
  %1380 = vmatprep.subr.bf16.mxu0 0
  %1381 = vmatpush2.bf16.msra.mxu0 0
  %1382 = vmatprep.subr.bf16.mxu0 0
  %1383 = vmatpush2.bf16.msra.mxu0 0
  %1384 = vmatprep.subr.bf16.mxu0 0
  %1385 = vmatpush2.bf16.msra.mxu0 0
  %1386 = vmatprep.subr.bf16.mxu0 0
  %1387 = vmatpush2.bf16.msra.mxu0 0
  %1388 = vmatprep.subr.bf16.mxu0 0
  %1389 = vmatpush2.bf16.msra.mxu0 0
  %1390 = vmatprep.subr.bf16.mxu0 0
  %1391 = vmatpush2.bf16.msra.mxu0 0
  %1392 = vmatprep.subr.bf16.mxu0 0
  %1393 = vmatpush2.bf16.msra.mxu0 0
  %1394 = vmatprep.subr.bf16.mxu0 0
  %1395 = vmatpush2.bf16.msra.mxu0 0
  %1396 = vmatprep.mubr.bf16.mxu0 0
  %1397 = vmatmul.mubr.bf16.gmra.mxu0 %v1341
  %v1398 = vpop.f32.mrf.mxu0
  %v1399 = vadd.f32 0.0, %v1398
  %v1400 = vpop.f32.mrf.mxu0
  %v1401 = vpop.f32.mrf.mxu0
  %v1402 = vadd.f32 0.0, %v1401
  %v1403 = vpop.f32.mrf.mxu0
  %1404 = vmatprep.mubr.bf16.mxu0 0
  %1405 = vmatmul.mubr.bf16.gmra.mxu0 %v1344
  %v1406 = vpop.f32.mrf.mxu0
  %v1407 = vadd.f32 0.0, %v1406
  %v1408 = vpop.f32.mrf.mxu0
  %v1409 = vpop.f32.mrf.mxu0
  %v1410 = vadd.f32 0.0, %v1409
  %v1411 = vpop.f32.mrf.mxu0
  %1412 = vmatprep.mubr.bf16.mxu0 0
  %1413 = vmatmul.mubr.bf16.gmra.mxu0 %v1347
  %v1414 = vpop.f32.mrf.mxu0
  %v1415 = vadd.f32 0.0, %v1414
  %v1416 = vpop.f32.mrf.mxu0
  %v1417 = vpop.f32.mrf.mxu0
  %v1418 = vadd.f32 0.0, %v1417
  %v1419 = vpop.f32.mrf.mxu0
  %1420 = vmatprep.mubr.bf16.mxu0 0
  %1421 = vmatmul.mubr.bf16.gmra.mxu0 %v1350
  %v1422 = vpop.f32.mrf.mxu0
  %v1423 = vadd.f32 0.0, %v1422
  %v1424 = vpop.f32.mrf.mxu0
  %v1425 = vpop.f32.mrf.mxu0
  %v1426 = vadd.f32 0.0, %v1425
  %v1427 = vpop.f32.mrf.mxu0
  %1428 = vmatprep.mubr.bf16.mxu0 0
  %1429 = vmatmul.mubr.bf16.gmra.mxu0 %v1353
  %v1430 = vpop.f32.mrf.mxu0
  %v1431 = vadd.f32 0.0, %v1430
  %v1432 = vpop.f32.mrf.mxu0
  %v1433 = vpop.f32.mrf.mxu0
  %v1434 = vadd.f32 0.0, %v1433
  %v1435 = vpop.f32.mrf.mxu0
  %1436 = vmatprep.mubr.bf16.mxu0 0
  %1437 = vmatmul.mubr.bf16.gmra.mxu0 %v1356
  %v1438 = vpop.f32.mrf.mxu0
  %v1439 = vadd.f32 0.0, %v1438
  %v1440 = vpop.f32.mrf.mxu0
  %v1441 = vpop.f32.mrf.mxu0
  %v1442 = vadd.f32 0.0, %v1441
  %v1443 = vpop.f32.mrf.mxu0
  %1444 = vmatprep.mubr.bf16.mxu0 0
  %1445 = vmatmul.mubr.bf16.gmra.mxu0 %v1359
  %v1446 = vpop.f32.mrf.mxu0
  %v1447 = vadd.f32 0.0, %v1446
  %v1448 = vpop.f32.mrf.mxu0
  %v1449 = vpop.f32.mrf.mxu0
  %v1450 = vadd.f32 0.0, %v1449
  %v1451 = vpop.f32.mrf.mxu0
  %1452 = vmatprep.mubr.bf16.mxu0 0
  %1453 = vmatmul.mubr.bf16.gmra.mxu0 %v1362
  %v1454 = vpop.f32.mrf.mxu0
  %v1455 = vadd.f32 0.0, %v1454
  %v1456 = vpop.f32.mrf.mxu0
  %v1457 = vpop.f32.mrf.mxu0
  %v1458 = vadd.f32 0.0, %v1457
  %v1459 = vpop.f32.mrf.mxu0
  %1460 = vdwg.mxu0
  %v1461 = vadd.f32 %v1200, %v1399
  %v1462 = vadd.f32 %v1201, %v1402
  %v1463 = vadd.f32 %v1202, %v1407
  %v1464 = vadd.f32 %v1203, %v1410
  %v1465 = vadd.f32 %v1204, %v1415
  %v1466 = vadd.f32 %v1205, %v1418
  %v1467 = vadd.f32 %v1206, %v1423
  %v1468 = vadd.f32 %v1207, %v1426
  %v1469 = vadd.f32 %v1208, %v1431
  %v1470 = vadd.f32 %v1209, %v1434
  %v1471 = vadd.f32 %v1210, %v1439
  %v1472 = vadd.f32 %v1211, %v1442
  %v1473 = vadd.f32 %v1212, %v1447
  %v1474 = vadd.f32 %v1213, %v1450
  %v1475 = vadd.f32 %v1214, %v1455
  %v1476 = vadd.f32 %v1215, %v1458
  %v1477 = vlaneseq
  %v1478 = vshrl.u32 %v1477, 7
  %v1479 = vadd.s32 %v1478, 8
  %vm1480 = vcmp.lt.s32.totalorder %v1478, 12
  %vm1481 = vcmp.lt.s32.totalorder %v1479, 12
  %v1482 = vsel %vm1480, %v1461, -inf
  %v1483 = vsel %vm1481, %v1462, -inf
  %v1484 = vsel %vm1480, %v1463, -inf
  %v1485 = vsel %vm1481, %v1464, -inf
  %v1486 = vsel %vm1480, %v1465, -inf
  %v1487 = vsel %vm1481, %v1466, -inf
  %v1488 = vsel %vm1480, %v1467, -inf
  %v1489 = vsel %vm1481, %v1468, -inf
  %v1490 = vsel %vm1480, %v1469, -inf
  %v1491 = vsel %vm1481, %v1470, -inf
  %v1492 = vsel %vm1480, %v1471, -inf
  %v1493 = vsel %vm1481, %v1472, -inf
  %v1494 = vsel %vm1480, %v1473, -inf
  %v1495 = vsel %vm1481, %v1474, -inf
  %v1496 = vsel %vm1480, %v1475, -inf
  %v1497 = vsel %vm1481, %v1476, -inf
  %v1498 = vmax.f32 %v1482, %v1483
  %v1499 = vrot.slane %v1498, 4
  %v1500 = vmax.f32 %v1498, %v1499
  %v1501 = vrot.slane %v1500, 2
  %v1502 = vmax.f32 %v1500, %v1501
  %v1503 = vrot.slane %v1502, 1
  %v1504 = vmax.f32 %v1502, %v1503
  %v1505 = vmax.f32 %v1484, %v1485
  %v1506 = vrot.slane %v1505, 4
  %v1507 = vmax.f32 %v1505, %v1506
  %v1508 = vrot.slane %v1507, 2
  %v1509 = vmax.f32 %v1507, %v1508
  %v1510 = vrot.slane %v1509, 1
  %v1511 = vmax.f32 %v1509, %v1510
  %v1512 = vmax.f32 %v1486, %v1487
  %v1513 = vrot.slane %v1512, 4
  %v1514 = vmax.f32 %v1512, %v1513
  %v1515 = vrot.slane %v1514, 2
  %v1516 = vmax.f32 %v1514, %v1515
  %v1517 = vrot.slane %v1516, 1
  %v1518 = vmax.f32 %v1516, %v1517
  %v1519 = vmax.f32 %v1488, %v1489
  %v1520 = vrot.slane %v1519, 4
  %v1521 = vmax.f32 %v1519, %v1520
  %v1522 = vrot.slane %v1521, 2
  %v1523 = vmax.f32 %v1521, %v1522
  %v1524 = vrot.slane %v1523, 1
  %v1525 = vmax.f32 %v1523, %v1524
  %v1526 = vmax.f32 %v1490, %v1491
  %v1527 = vrot.slane %v1526, 4
  %v1528 = vmax.f32 %v1526, %v1527
  %v1529 = vrot.slane %v1528, 2
  %v1530 = vmax.f32 %v1528, %v1529
  %v1531 = vrot.slane %v1530, 1
  %v1532 = vmax.f32 %v1530, %v1531
  %v1533 = vmax.f32 %v1492, %v1493
  %v1534 = vrot.slane %v1533, 4
  %v1535 = vmax.f32 %v1533, %v1534
  %v1536 = vrot.slane %v1535, 2
  %v1537 = vmax.f32 %v1535, %v1536
  %v1538 = vrot.slane %v1537, 1
  %v1539 = vmax.f32 %v1537, %v1538
  %v1540 = vmax.f32 %v1494, %v1495
  %v1541 = vrot.slane %v1540, 4
  %v1542 = vmax.f32 %v1540, %v1541
  %v1543 = vrot.slane %v1542, 2
  %v1544 = vmax.f32 %v1542, %v1543
  %v1545 = vrot.slane %v1544, 1
  %v1546 = vmax.f32 %v1544, %v1545
  %v1547 = vmax.f32 %v1496, %v1497
  %v1548 = vrot.slane %v1547, 4
  %v1549 = vmax.f32 %v1547, %v1548
  %v1550 = vrot.slane %v1549, 2
  %v1551 = vmax.f32 %v1549, %v1550
  %v1552 = vrot.slane %v1551, 1
  %v1553 = vmax.f32 %v1551, %v1552
  %v1554 = vld [vmem:[%s2] sm:$0x1]
  %v1556 = vlaneseq
  %v1557 = vshrl.u32 %v1556, 7
  %v1558 = vsub.s32 0, %v1557
  %v1559 = vrot.slane %v1554, %v1558
  %v1561 = vadd.f32 %v1504, %v1559
  %v1562 = vadd.f32 %v1511, %v1559
  %v1563 = vadd.f32 %v1518, %v1559
  %v1564 = vadd.f32 %v1525, %v1559
  %v1565 = vadd.f32 %v1532, %v1559
  %v1566 = vadd.f32 %v1539, %v1559
  %v1567 = vadd.f32 %v1546, %v1559
  %v1568 = vadd.f32 %v1553, %v1559
  %v1569 = vmax.f32 %v1561, 0.0
  %v1570 = vmax.f32 %v1562, 0.0
  %v1571 = vmax.f32 %v1563, 0.0
  %v1572 = vmax.f32 %v1564, 0.0
  %v1573 = vmax.f32 %v1565, 0.0
  %v1574 = vmax.f32 %v1566, 0.0
  %v1575 = vmax.f32 %v1567, 0.0
  %v1576 = vmax.f32 %v1568, 0.0
  %v1577 = vld [vmem:[%s3] sm:$0x1]
  %v1578 = vpack.c.bf16 %v1569, %v1569
  %v1579 = vpack.c.bf16 %v1570, %v1570
  %v1580 = vpack.c.bf16 %v1571, %v1571
  %v1581 = vpack.c.bf16 %v1572, %v1572
  %v1582 = vpack.c.bf16 %v1573, %v1573
  %v1583 = vpack.c.bf16 %v1574, %v1574
  %v1584 = vpack.c.bf16 %v1575, %v1575
  %v1585 = vpack.c.bf16 %v1576, %v1576
  %v1586 = vld [vmem:[#allocation2] sm:$0x1]
  %1588 = vset.pattern.permute.xlu0 0
  %1589 = vperm.xlu0 %1588, %v1586
  %v1590 = vpop.permute.xlu0 %1589
  %v1592 = vlaneseq
  %v1593 = vshrl.u32 %v1592, 7
  %v1594 = vsub.s32 0, %v1593
  %v1595 = vrot.slane %v1590, %v1594
  %v1604 = vunpack.c.l.b16 %v1578
  %v1605 = vunpack.c.l.b16 %v1579
  %v1606 = vunpack.c.l.b16 %v1580
  %v1607 = vunpack.c.l.b16 %v1581
  %v1608 = vunpack.c.l.b16 %v1582
  %v1609 = vunpack.c.l.b16 %v1583
  %v1610 = vunpack.c.l.b16 %v1584
  %v1611 = vunpack.c.l.b16 %v1585
  %v1612 = vrot.slane %v1605, 7
  %vm1613 = vcmask 1041409
  %v1614 = vsel %vm1613, %v1612, %v1604
  %v1615 = vrot.slane %v1606, 6
  %vm1616 = vcmask 1042434
  %v1617 = vsel %vm1616, %v1615, %v1614
  %v1618 = vrot.slane %v1607, 5
  %vm1619 = vcmask 1043459
  %v1620 = vsel %vm1619, %v1618, %v1617
  %v1621 = vrot.slane %v1608, 4
  %vm1622 = vcmask 1044484
  %v1623 = vsel %vm1622, %v1621, %v1620
  %v1624 = vrot.slane %v1609, 3
  %vm1625 = vcmask 1045509
  %v1626 = vsel %vm1625, %v1624, %v1623
  %v1627 = vrot.slane %v1610, 2
  %vm1628 = vcmask 1046534
  %v1629 = vsel %vm1628, %v1627, %v1626
  %v1630 = vrot.slane %v1611, 1
  %vm1631 = vcmask 1047559
  %v1632 = vsel %vm1631, %v1630, %v1629
  %v1633 = vpack.c.b16 %v1632, %v1632
  %1635 = vmatprep.subr.bf16.mxu0 0
  %1636 = vmatpush1.bf16.xpose.msra.mxu0 0
  %1637 = vmatprep.subr.bf16.mxu0 0
  %1638 = vmatpush1.bf16.xpose.msra.mxu0 0
  %1639 = vmatprep.subr.bf16.mxu0 0
  %1640 = vmatpush1.bf16.xpose.msra.mxu0 0
  %1641 = vmatprep.subr.bf16.mxu0 0
  %1642 = vmatpush1.bf16.xpose.msra.mxu0 0
  %1643 = vmatprep.subr.bf16.mxu0 0
  %1644 = vmatpush1.bf16.xpose.msra.mxu0 0
  %1645 = vmatprep.subr.bf16.mxu0 0
  %1646 = vmatpush1.bf16.xpose.msra.mxu0 0
  %1647 = vmatprep.subr.bf16.mxu0 0
  %1648 = vmatpush1.bf16.xpose.msra.mxu0 0
  %1649 = vmatprep.subr.bf16.mxu0 0
  %1650 = vmatpush1.bf16.xpose.msra.mxu0 %v1633
  %1651 = vmatprep.subr.bf16.mxu0 0
  %1652 = vmatpush2.bf16.xpose.msra.mxu0 0
  %1653 = vmatprep.subr.bf16.mxu0 0
  %1654 = vmatpush2.bf16.xpose.msra.mxu0 0
  %1655 = vmatprep.subr.bf16.mxu0 0
  %1656 = vmatpush2.bf16.xpose.msra.mxu0 0
  %1657 = vmatprep.subr.bf16.mxu0 0
  %1658 = vmatpush2.bf16.xpose.msra.mxu0 0
  %1659 = vmatprep.subr.bf16.mxu0 0
  %1660 = vmatpush2.bf16.xpose.msra.mxu0 0
  %1661 = vmatprep.subr.bf16.mxu0 0
  %1662 = vmatpush2.bf16.xpose.msra.mxu0 0
  %1663 = vmatprep.subr.bf16.mxu0 0
  %1664 = vmatpush2.bf16.xpose.msra.mxu0 0
  %1665 = vmatprep.subr.bf16.mxu0 0
  %1666 = vmatpush2.bf16.xpose.msra.mxu0 0
  %1667 = vmatprep.mubr.bf16.mxu0 0
  %1668 = vmatmul.mubr.bf16.gmra.mxu0 %v1577
  %v1669 = vpop.f32.mrf.mxu0
  %v1670 = vadd.f32 %v1595, %v1669
  %v1671 = vpop.f32.mrf.mxu0
  %v1672 = vpop.f32.mrf.mxu0
  %v1673 = vpop.f32.mrf.mxu0
  %1674 = vdwg.mxu0
  %v1675 = vxor.u32 %v1670, 2147483648
  %v1676 = vmul.f32 %v1675, 1.442695
  %v1677 = vpow.pop %v1676
  %v1678 = vadd.f32 %v1677, 1.0
  %v1679 = vrcp.pop %v1678
  %v1680 = vmul.f32 1.0, %v1679
  %vm1681 = vcmask 57344
  %1682 = vst.msk [vmem:[%s5] sm:$0x1] %vm1681, %v1680
  // Predicated region
  $region22: #{cnn_classifier_forward.1} parent=0 // pred_check
    _
  $region23: #{cnn_classifier_forward.1} parent=0 // pred_check_branch
    %1684 = sbr.rel (0) target = $region25
  $region24: #{cnn_classifier_forward.1} parent=0 // pred_region
    _
  $region25: #{cnn_classifier_forward.1} parent=0 // pred_fallthru
    _
  // Predicated region
  $region26: #{cnn_classifier_forward.1} parent=0 // pred_check
    _
  $region27: #{cnn_classifier_forward.1} parent=0 // pred_check_branch
    %1686 = sbr.rel (0) target = $region29
  $region28: #{cnn_classifier_forward.1} parent=0 // pred_region
    _
  $region29: #{cnn_classifier_forward.1} parent=0 // pred_fallthru
    _

</llo_original>
